<compile_context>
chip_gen: v7x
topology: tpu7x:2x2x1
jax: 0.10.0
libtpu: 0.0.40
codegen_flags: <defaults>
</compile_context>

<pallas_src>
import functools
import math

import jax
import jax.numpy as jnp
from jax import lax
from jax.experimental import pallas as pl
from jax.experimental.pallas import tpu as pltpu


# -----------------------------------------------------------------------------
# Kernel: one batch element per grid step
# -----------------------------------------------------------------------------
def _layernorm(z, g, b, eps):
    mu = jnp.mean(z, axis=-1, keepdims=True)
    c = z - mu
    var = jnp.mean(c * c, axis=-1, keepdims=True)
    return c * lax.rsqrt(var + eps) * g + b


def _block_kernel(num_heads, head_dim, eps,
                  x_ref, refine_ref,
                  ln1g_ref, ln1b_ref,
                  wqkv_ref, bqkv_ref, wo_ref, bo_ref,
                  ln2g_ref, ln2b_ref,
                  w1_ref, b1_ref, w2_ref, b2_ref,
                  o_ref,
                  ctx_ref):
    D = num_heads * head_dim
    x = x_ref[...]            # (N, D) f32 -- one batch element
    refine = refine_ref[...]  # (N, D) f32

    # ---- attention branch ---------------------------------------------------
    xn = _layernorm(x, ln1g_ref[...], ln1b_ref[...], eps)

    # fused QKV: one (N, D) @ (D, 3D) bf16 matmul, f32 accumulation
    qkv = jnp.dot(xn.astype(jnp.bfloat16), wqkv_ref[...],
                  preferred_element_type=jnp.float32) + bqkv_ref[...]
    q = qkv[:, 0:D] * (1.0 / math.sqrt(head_dim))   # scale folded into q
    k = qkv[:, D:2 * D]
    v = qkv[:, 2 * D:3 * D] * refine                # refine-modulated values

    # Per-head attention; context for head h lands in lanes [h*hd, (h+1)*hd)
    # of the VMEM scratch so the output projection runs once with full K=D.
    # TODO(synk): at real dims (H=12, hd=64) move heads onto a grid axis /
    #             fori_loop and pack >=2 heads per MXU call.
    for h in range(num_heads):
        lo = h * head_dim
        qh = q[:, lo:lo + head_dim].astype(jnp.bfloat16)    # (N, hd)
        kh = k[:, lo:lo + head_dim].astype(jnp.bfloat16)
        vh = v[:, lo:lo + head_dim].astype(jnp.bfloat16)
        # q @ k^T without materializing a transposed tile
        s = lax.dot_general(qh, kh, (((1,), (1,)), ((), ())),
                            preferred_element_type=jnp.float32)      # (N, N)
        s = s - jnp.max(s, axis=-1, keepdims=True)
        p = jnp.exp(s)
        p = p * pl.reciprocal(jnp.sum(p, axis=-1, keepdims=True), approx=True)
        ctx_ref[:, lo:lo + head_dim] = jnp.dot(
            p.astype(jnp.bfloat16), vh, preferred_element_type=jnp.float32)

    # single output projection with full contraction depth K = D
    attn = jnp.dot(ctx_ref[...].astype(jnp.bfloat16), wo_ref[...],
                   preferred_element_type=jnp.float32) + bo_ref[...]
    x1 = attn + x

    # ---- MLP branch -----------------------------------------------------------
    xn2 = _layernorm(x1, ln2g_ref[...], ln2b_ref[...], eps)
    hmid = jnp.dot(xn2.astype(jnp.bfloat16), w1_ref[...],
                   preferred_element_type=jnp.float32) + b1_ref[...]
    # exact (erf) GELU in f32, matching torch.nn.functional.gelu default
    hmid = 0.5 * hmid * (1.0 + lax.erf(hmid * (1.0 / math.sqrt(2.0))))
    y = jnp.dot(hmid.astype(jnp.bfloat16), w2_ref[...],
                preferred_element_type=jnp.float32) + b2_ref[...]

    o_ref[...] = y + x1


# -----------------------------------------------------------------------------
# One-time weight staging (hoisted out of the per-call path)
# -----------------------------------------------------------------------------
def prepare_block_params(params):
    wqkv = jnp.concatenate([params["wq"], params["wk"], params["wv"]], axis=1)  # (D, 3D)
    bqkv = jnp.concatenate([params["bq"], params["bk"], params["bv"]], axis=1)  # (1, 3D)
    return {
        "ln1_g": params["ln1_g"].astype(jnp.float32),
        "ln1_b": params["ln1_b"].astype(jnp.float32),
        "wqkv": wqkv.astype(jnp.bfloat16),
        "bqkv": bqkv.astype(jnp.float32),
        "wo": params["wo"].astype(jnp.bfloat16),
        "bo": params["bo"].astype(jnp.float32),
        "ln2_g": params["ln2_g"].astype(jnp.float32),
        "ln2_b": params["ln2_b"].astype(jnp.float32),
        "w1": params["w1"].astype(jnp.bfloat16),
        "b1": params["b1"].astype(jnp.float32),
        "w2": params["w2"].astype(jnp.bfloat16),
        "b2": params["b2"].astype(jnp.float32),
    }


# -----------------------------------------------------------------------------
# Wrapper
# -----------------------------------------------------------------------------
def block_forward(x, refine, prep, num_heads):
    """x: (B, N, D) f32;  refine: (B, D, H, W) f32 with H*W == N;
    prep: output of prepare_block_params (bf16-staged, QKV-fused weights)."""
    B, N, D = x.shape
    head_dim = D // num_heads

    # 'b c h w -> b (h w) c' (plain XLA glue).
    # TODO(synk): fold this transpose into the kernel (pltpu.einshape per tile).
    refine_bnd = jnp.transpose(refine.reshape(B, D, N), (0, 2, 1))

    ordered = [prep[k] for k in ("ln1_g", "ln1_b", "wqkv", "bqkv", "wo", "bo",
                                 "ln2_g", "ln2_b", "w1", "b1", "w2", "b2")]

    def resident(arr):
        # Same block index every grid step -> weights stay resident in VMEM.
        # TODO(synk): pipeline_mode=pl.Buffered(1) to drop the second weight
        #             buffer once weight footprints matter (real dims / v7x, v5e).
        return pl.BlockSpec(arr.shape, lambda b: (0, 0))

    per_batch = pl.BlockSpec((None, N, D), lambda b: (b, 0, 0))  # leading dim squeezed

    in_specs = [per_batch, per_batch] + [resident(a) for a in ordered]
    inputs = [x, refine_bnd] + ordered

    # scoped-VMEM budget from actual tile sizes (double-buffered blocks) + headroom
    io_block_bytes = 3 * N * D * 4                          # x, refine, out blocks (f32)
    w_bytes = sum(int(a.size) * a.dtype.itemsize for a in ordered)
    scratch_bytes = N * D * 4
    vmem_limit = int(2 * (io_block_bytes + w_bytes) + scratch_bytes + (4 << 20))

    kernel = functools.partial(_block_kernel, num_heads, head_dim, 1e-6)

    out = pl.pallas_call(
        kernel,
        out_shape=jax.ShapeDtypeStruct((B, N, D), jnp.float32),
        grid_spec=pltpu.PrefetchScalarGridSpec(
            num_scalar_prefetch=0,
            grid=(B,),                                   # batch axis: pipelined + megacore
            in_specs=in_specs,
            out_specs=per_batch,
            scratch_shapes=[pltpu.VMEM((N, D), jnp.float32)],   # per-head context
        ),
        compiler_params=pltpu.CompilerParams(
            dimension_semantics=("parallel",),
            vmem_limit_bytes=vmem_limit,
        ),
    )(*inputs)
    return out


# -----------------------------------------------------------------------------
# Pure-JAX reference (for correctness check)
# -----------------------------------------------------------------------------
def block_reference(x, refine, params, num_heads):
    B, N, D = x.shape
    hd = D // num_heads
    refine_r = jnp.transpose(refine.reshape(B, D, N), (0, 2, 1))

    def ln(z, g, b):
        mu = jnp.mean(z, -1, keepdims=True)
        var = jnp.mean((z - mu) ** 2, -1, keepdims=True)
        return (z - mu) / jnp.sqrt(var + 1e-6) * g + b

    h = x
    xn = ln(x, params["ln1_g"], params["ln1_b"])
    q = xn @ params["wq"] + params["bq"]
    k = xn @ params["wk"] + params["bk"]
    v = (xn @ params["wv"] + params["bv"]) * refine_r

    def split(t):  # (B,N,D) -> (B,H,N,hd)
        return jnp.transpose(t.reshape(B, N, num_heads, hd), (0, 2, 1, 3))

    qh, kh, vh = split(q), split(k), split(v)
    s = jnp.einsum("bhnd,bhmd->bhnm", qh, kh) / math.sqrt(hd)
    p = jax.nn.softmax(s, axis=-1)
    ctx = jnp.einsum("bhnm,bhmd->bhnd", p, vh)
    ctx = jnp.transpose(ctx, (0, 2, 1, 3)).reshape(B, N, D)
    x1 = ctx @ params["wo"] + params["bo"] + h

    xn2 = ln(x1, params["ln2_g"], params["ln2_b"])
    hmid = xn2 @ params["w1"] + params["b1"]
    hmid = 0.5 * hmid * (1.0 + lax.erf(hmid / math.sqrt(2.0)))
    y = hmid @ params["w2"] + params["b2"]
    return y + x1


# -----------------------------------------------------------------------------
# Main
# -----------------------------------------------------------------------------
if __name__ == "__main__":
    # Small config consistent with the module: hidden=32, heads=4, mlp_dim=64,
    # tokens N=16 (H=W=4), batch B=2.
    # NOTE: toy shapes under-fill the MXU / force masked stores -- do not use
    # them to extrapolate performance to real ViT dims.
    B, D, H, W = 2, 32, 4, 4
    N = H * W
    num_heads = 4
    mlp_dim = 64

    key = jax.random.PRNGKey(0)
    keys = jax.random.split(key, 16)

    def w(k, shape, scale=0.05):
        return (scale * jax.random.normal(k, shape)).astype(jnp.float32)

    params = {
        "ln1_g": jnp.ones((1, D), jnp.float32),
        "ln1_b": jnp.zeros((1, D), jnp.float32),
        "wq": w(keys[0], (D, D)), "bq": w(keys[1], (1, D)),
        "wk": w(keys[2], (D, D)), "bk": w(keys[3], (1, D)),
        "wv": w(keys[4], (D, D)), "bv": w(keys[5], (1, D)),
        "wo": w(keys[6], (D, D)), "bo": w(keys[7], (1, D)),
        "ln2_g": jnp.ones((1, D), jnp.float32),
        "ln2_b": jnp.zeros((1, D), jnp.float32),
        "w1": w(keys[8], (D, mlp_dim)), "b1": w(keys[9], (1, mlp_dim), 1e-6),
        "w2": w(keys[10], (mlp_dim, D)), "b2": w(keys[11], (1, D), 1e-6),
    }

    x = jax.random.normal(keys[12], (B, N, D), dtype=jnp.float32)
    refine = jax.random.normal(keys[13], (B, D, H, W), dtype=jnp.float32)

    prep = prepare_block_params(params)          # one-time weight staging
    out = block_forward(x, refine, prep, num_heads)
    out = jax.block_until_ready(out)

    ref = block_reference(x, refine, params, num_heads)
    assert out.shape == (B, N, D)
    # bf16 matmul operands + approx reciprocal in softmax -> relaxed tolerance
    assert jnp.allclose(out, ref, atol=2e-2, rtol=2e-2), "mismatch vs reference"

    print("KERNEL_OK")
</pallas_src>

<mosaic_0001>
module attributes {stable_mosaic.version = 11 : i64} {
  func.func @_block_kernel(%arg0: i32, %arg1: memref<1x16x32xf32, #tpu.memory_space<vmem>>, %arg2: memref<1x16x32xf32, #tpu.memory_space<vmem>>, %arg3: memref<1x32xf32, #tpu.memory_space<vmem>>, %arg4: memref<1x32xf32, #tpu.memory_space<vmem>>, %arg5: memref<32x96xbf16, #tpu.memory_space<vmem>>, %arg6: memref<1x96xf32, #tpu.memory_space<vmem>>, %arg7: memref<32x32xbf16, #tpu.memory_space<vmem>>, %arg8: memref<1x32xf32, #tpu.memory_space<vmem>>, %arg9: memref<1x32xf32, #tpu.memory_space<vmem>>, %arg10: memref<1x32xf32, #tpu.memory_space<vmem>>, %arg11: memref<32x64xbf16, #tpu.memory_space<vmem>>, %arg12: memref<1x64xf32, #tpu.memory_space<vmem>>, %arg13: memref<64x32xbf16, #tpu.memory_space<vmem>>, %arg14: memref<1x32xf32, #tpu.memory_space<vmem>>, %arg15: memref<1x16x32xf32, #tpu.memory_space<vmem>>, %arg16: memref<16x32xf32, #tpu.memory_space<vmem>>) attributes {dimension_semantics = [#tpu.dimension_semantics<parallel>], iteration_bounds = array<i64: 2>, scalar_prefetch = 0 : i64, scratch_operands = 1 : i64, tpu.core_type = #tpu.core_type<tc>, window_params = [{transform_indices = @transform_0, window_bounds = array<i64: 1, 16, 32>}, {transform_indices = @transform_1, window_bounds = array<i64: 1, 16, 32>}, {pipeline_mode = #tpu.pipeline_mode<synchronous>, transform_indices = @transform_2, window_bounds = array<i64: 1, 32>}, {pipeline_mode = #tpu.pipeline_mode<synchronous>, transform_indices = @transform_3, window_bounds = array<i64: 1, 32>}, {pipeline_mode = #tpu.pipeline_mode<synchronous>, transform_indices = @transform_4, window_bounds = array<i64: 32, 96>}, {pipeline_mode = #tpu.pipeline_mode<synchronous>, transform_indices = @transform_5, window_bounds = array<i64: 1, 96>}, {pipeline_mode = #tpu.pipeline_mode<synchronous>, transform_indices = @transform_6, window_bounds = array<i64: 32, 32>}, {pipeline_mode = #tpu.pipeline_mode<synchronous>, transform_indices = @transform_7, window_bounds = array<i64: 1, 32>}, {pipeline_mode = #tpu.pipeline_mode<synchronous>, transform_indices = @transform_8, window_bounds = array<i64: 1, 32>}, {pipeline_mode = #tpu.pipeline_mode<synchronous>, transform_indices = @transform_9, window_bounds = array<i64: 1, 32>}, {pipeline_mode = #tpu.pipeline_mode<synchronous>, transform_indices = @transform_10, window_bounds = array<i64: 32, 64>}, {pipeline_mode = #tpu.pipeline_mode<synchronous>, transform_indices = @transform_11, window_bounds = array<i64: 1, 64>}, {pipeline_mode = #tpu.pipeline_mode<synchronous>, transform_indices = @transform_12, window_bounds = array<i64: 64, 32>}, {pipeline_mode = #tpu.pipeline_mode<synchronous>, transform_indices = @transform_13, window_bounds = array<i64: 1, 32>}, {transform_indices = @transform_14, window_bounds = array<i64: 1, 16, 32>}]} {
    %c0 = arith.constant 0 : index
    %c0_0 = arith.constant 0 : index
    %c0_1 = arith.constant 0 : index
    %0 = vector.load %arg1[%c0, %c0_0, %c0_1] : memref<1x16x32xf32, #tpu.memory_space<vmem>>, vector<1x16x32xf32>
    %1 = vector.shape_cast %0 : vector<1x16x32xf32> to vector<16x32xf32>
    %c0_2 = arith.constant 0 : index
    %c0_3 = arith.constant 0 : index
    %c0_4 = arith.constant 0 : index
    %2 = vector.load %arg2[%c0_2, %c0_3, %c0_4] : memref<1x16x32xf32, #tpu.memory_space<vmem>>, vector<1x16x32xf32>
    %3 = vector.shape_cast %2 : vector<1x16x32xf32> to vector<16x32xf32>
    %c0_5 = arith.constant 0 : index
    %c0_6 = arith.constant 0 : index
    %4 = vector.load %arg3[%c0_5, %c0_6] : memref<1x32xf32, #tpu.memory_space<vmem>>, vector<1x32xf32>
    %c0_7 = arith.constant 0 : index
    %c0_8 = arith.constant 0 : index
    %5 = vector.load %arg4[%c0_7, %c0_8] : memref<1x32xf32, #tpu.memory_space<vmem>>, vector<1x32xf32>
    %cst = arith.constant dense<0.000000e+00> : vector<16xf32>
    %6 = vector.multi_reduction <add>, %1, %cst [1] : vector<16x32xf32> to vector<16xf32>
    %7 = vector.shape_cast %6 : vector<16xf32> to vector<16x1xf32>
    %cst_9 = arith.constant 3.200000e+01 : f32
    %8 = vector.broadcast %cst_9 : f32 to vector<16x1xf32>
    %9 = arith.divf %7, %8 : vector<16x1xf32>
    %10 = vector.broadcast %9 : vector<16x1xf32> to vector<16x32xf32>
    %11 = arith.subf %1, %10 : vector<16x32xf32>
    %12 = arith.mulf %11, %11 : vector<16x32xf32>
    %cst_10 = arith.constant dense<0.000000e+00> : vector<16xf32>
    %13 = vector.multi_reduction <add>, %12, %cst_10 [1] : vector<16x32xf32> to vector<16xf32>
    %14 = vector.shape_cast %13 : vector<16xf32> to vector<16x1xf32>
    %cst_11 = arith.constant 3.200000e+01 : f32
    %15 = vector.broadcast %cst_11 : f32 to vector<16x1xf32>
    %16 = arith.divf %14, %15 : vector<16x1xf32>
    %cst_12 = arith.constant 9.99999997E-7 : f32
    %17 = vector.broadcast %cst_12 : f32 to vector<16x1xf32>
    %18 = arith.addf %16, %17 : vector<16x1xf32>
    %19 = math.rsqrt %18 : vector<16x1xf32>
    %20 = vector.broadcast %19 : vector<16x1xf32> to vector<16x32xf32>
    %21 = arith.mulf %11, %20 : vector<16x32xf32>
    %22 = vector.broadcast %4 : vector<1x32xf32> to vector<16x32xf32>
    %23 = arith.mulf %21, %22 : vector<16x32xf32>
    %24 = vector.broadcast %5 : vector<1x32xf32> to vector<16x32xf32>
    %25 = arith.addf %23, %24 : vector<16x32xf32>
    %26 = arith.truncf %25 : vector<16x32xf32> to vector<16x32xbf16>
    %c0_13 = arith.constant 0 : index
    %c0_14 = arith.constant 0 : index
    %27 = vector.load %arg5[%c0_13, %c0_14] : memref<32x96xbf16, #tpu.memory_space<vmem>>, vector<32x96xbf16>
    %cst_15 = arith.constant dense<0.000000e+00> : vector<16x96xf32>
    %28 = tpu.matmul %26, %27, %cst_15 {dimension_numbers = #tpu.dot_dimension_numbers<[1], [0], [0], [1], [0, 0, 1, 1], [], []>} : vector<16x32xbf16>, vector<32x96xbf16>, vector<16x96xf32> -> vector<16x96xf32>
    %c0_16 = arith.constant 0 : index
    %c0_17 = arith.constant 0 : index
    %29 = vector.load %arg6[%c0_16, %c0_17] : memref<1x96xf32, #tpu.memory_space<vmem>>, vector<1x96xf32>
    %30 = vector.broadcast %29 : vector<1x96xf32> to vector<16x96xf32>
    %31 = arith.addf %28, %30 : vector<16x96xf32>
    %32 = vector.extract_strided_slice %31 {offsets = [0, 0], sizes = [16, 32], strides = [1, 1]} : vector<16x96xf32> to vector<16x32xf32>
    %cst_18 = arith.constant 0.353553385 : f32
    %33 = vector.broadcast %cst_18 : f32 to vector<16x32xf32>
    %34 = arith.mulf %32, %33 : vector<16x32xf32>
    %35 = vector.extract_strided_slice %31 {offsets = [0, 32], sizes = [16, 32], strides = [1, 1]} : vector<16x96xf32> to vector<16x32xf32>
    %36 = vector.extract_strided_slice %31 {offsets = [0, 64], sizes = [16, 32], strides = [1, 1]} : vector<16x96xf32> to vector<16x32xf32>
    %37 = arith.mulf %36, %3 : vector<16x32xf32>
    %38 = vector.extract_strided_slice %34 {offsets = [0, 0], sizes = [16, 8], strides = [1, 1]} : vector<16x32xf32> to vector<16x8xf32>
    %39 = arith.truncf %38 : vector<16x8xf32> to vector<16x8xbf16>
    %40 = vector.extract_strided_slice %35 {offsets = [0, 0], sizes = [16, 8], strides = [1, 1]} : vector<16x32xf32> to vector<16x8xf32>
    %41 = arith.truncf %40 : vector<16x8xf32> to vector<16x8xbf16>
    %42 = vector.extract_strided_slice %37 {offsets = [0, 0], sizes = [16, 8], strides = [1, 1]} : vector<16x32xf32> to vector<16x8xf32>
    %43 = arith.truncf %42 : vector<16x8xf32> to vector<16x8xbf16>
    %cst_19 = arith.constant dense<0.000000e+00> : vector<16x16xf32>
    %44 = tpu.matmul %39, %41, %cst_19 {dimension_numbers = #tpu.dot_dimension_numbers<[1], [1], [0], [0], [0, 0, 1, 0], [], []>} : vector<16x8xbf16>, vector<16x8xbf16>, vector<16x16xf32> -> vector<16x16xf32>
    %cst_20 = arith.constant dense<0xFF800000> : vector<16xf32>
    %45 = vector.multi_reduction <maximumf>, %44, %cst_20 [1] : vector<16x16xf32> to vector<16xf32>
    %46 = vector.shape_cast %45 : vector<16xf32> to vector<16x1xf32>
    %47 = vector.broadcast %46 : vector<16x1xf32> to vector<16x16xf32>
    %48 = arith.subf %44, %47 : vector<16x16xf32>
    %49 = math.exp %48 : vector<16x16xf32>
    %cst_21 = arith.constant dense<0.000000e+00> : vector<16xf32>
    %50 = vector.multi_reduction <add>, %49, %cst_21 [1] : vector<16x16xf32> to vector<16xf32>
    %51 = vector.shape_cast %50 : vector<16xf32> to vector<16x1xf32>
    %52 = tpu.reciprocal %51 {approx = true} : vector<16x1xf32> -> vector<16x1xf32>
    %53 = vector.broadcast %52 : vector<16x1xf32> to vector<16x16xf32>
    %54 = arith.mulf %49, %53 : vector<16x16xf32>
    %55 = arith.truncf %54 : vector<16x16xf32> to vector<16x16xbf16>
    %cst_22 = arith.constant dense<0.000000e+00> : vector<16x8xf32>
    %56 = tpu.matmul %55, %43, %cst_22 {dimension_numbers = #tpu.dot_dimension_numbers<[1], [0], [0], [1], [0, 0, 1, 1], [], []>} : vector<16x16xbf16>, vector<16x8xbf16>, vector<16x8xf32> -> vector<16x8xf32>
    %c0_23 = arith.constant 0 : index
    %c0_24 = arith.constant 0 : index
    %57 = vector.load %arg16[%c0_23, %c0_24] : memref<16x32xf32, #tpu.memory_space<vmem>>, vector<16x8xf32>
    tpu.vector_store %arg16[%c0_23, %c0_24], %56 {strides = array<i32>} : memref<16x32xf32, #tpu.memory_space<vmem>>, vector<16x8xf32>,
    %58 = vector.extract_strided_slice %34 {offsets = [0, 8], sizes = [16, 8], strides = [1, 1]} : vector<16x32xf32> to vector<16x8xf32>
    %59 = arith.truncf %58 : vector<16x8xf32> to vector<16x8xbf16>
    %60 = vector.extract_strided_slice %35 {offsets = [0, 8], sizes = [16, 8], strides = [1, 1]} : vector<16x32xf32> to vector<16x8xf32>
    %61 = arith.truncf %60 : vector<16x8xf32> to vector<16x8xbf16>
    %62 = vector.extract_strided_slice %37 {offsets = [0, 8], sizes = [16, 8], strides = [1, 1]} : vector<16x32xf32> to vector<16x8xf32>
    %63 = arith.truncf %62 : vector<16x8xf32> to vector<16x8xbf16>
    %cst_25 = arith.constant dense<0.000000e+00> : vector<16x16xf32>
    %64 = tpu.matmul %59, %61, %cst_25 {dimension_numbers = #tpu.dot_dimension_numbers<[1], [1], [0], [0], [0, 0, 1, 0], [], []>} : vector<16x8xbf16>, vector<16x8xbf16>, vector<16x16xf32> -> vector<16x16xf32>
    %cst_26 = arith.constant dense<0xFF800000> : vector<16xf32>
    %65 = vector.multi_reduction <maximumf>, %64, %cst_26 [1] : vector<16x16xf32> to vector<16xf32>
    %66 = vector.shape_cast %65 : vector<16xf32> to vector<16x1xf32>
    %67 = vector.broadcast %66 : vector<16x1xf32> to vector<16x16xf32>
    %68 = arith.subf %64, %67 : vector<16x16xf32>
    %69 = math.exp %68 : vector<16x16xf32>
    %cst_27 = arith.constant dense<0.000000e+00> : vector<16xf32>
    %70 = vector.multi_reduction <add>, %69, %cst_27 [1] : vector<16x16xf32> to vector<16xf32>
    %71 = vector.shape_cast %70 : vector<16xf32> to vector<16x1xf32>
    %72 = tpu.reciprocal %71 {approx = true} : vector<16x1xf32> -> vector<16x1xf32>
    %73 = vector.broadcast %72 : vector<16x1xf32> to vector<16x16xf32>
    %74 = arith.mulf %69, %73 : vector<16x16xf32>
    %75 = arith.truncf %74 : vector<16x16xf32> to vector<16x16xbf16>
    %cst_28 = arith.constant dense<0.000000e+00> : vector<16x8xf32>
    %76 = tpu.matmul %75, %63, %cst_28 {dimension_numbers = #tpu.dot_dimension_numbers<[1], [0], [0], [1], [0, 0, 1, 1], [], []>} : vector<16x16xbf16>, vector<16x8xbf16>, vector<16x8xf32> -> vector<16x8xf32>
    %c0_29 = arith.constant 0 : index
    %c8 = arith.constant 8 : index
    %77 = vector.load %arg16[%c0_29, %c8] : memref<16x32xf32, #tpu.memory_space<vmem>>, vector<16x8xf32>
    tpu.vector_store %arg16[%c0_29, %c8], %76 {strides = array<i32>} : memref<16x32xf32, #tpu.memory_space<vmem>>, vector<16x8xf32>,
    %78 = vector.extract_strided_slice %34 {offsets = [0, 16], sizes = [16, 8], strides = [1, 1]} : vector<16x32xf32> to vector<16x8xf32>
    %79 = arith.truncf %78 : vector<16x8xf32> to vector<16x8xbf16>
    %80 = vector.extract_strided_slice %35 {offsets = [0, 16], sizes = [16, 8], strides = [1, 1]} : vector<16x32xf32> to vector<16x8xf32>
    %81 = arith.truncf %80 : vector<16x8xf32> to vector<16x8xbf16>
    %82 = vector.extract_strided_slice %37 {offsets = [0, 16], sizes = [16, 8], strides = [1, 1]} : vector<16x32xf32> to vector<16x8xf32>
    %83 = arith.truncf %82 : vector<16x8xf32> to vector<16x8xbf16>
    %cst_30 = arith.constant dense<0.000000e+00> : vector<16x16xf32>
    %84 = tpu.matmul %79, %81, %cst_30 {dimension_numbers = #tpu.dot_dimension_numbers<[1], [1], [0], [0], [0, 0, 1, 0], [], []>} : vector<16x8xbf16>, vector<16x8xbf16>, vector<16x16xf32> -> vector<16x16xf32>
    %cst_31 = arith.constant dense<0xFF800000> : vector<16xf32>
    %85 = vector.multi_reduction <maximumf>, %84, %cst_31 [1] : vector<16x16xf32> to vector<16xf32>
    %86 = vector.shape_cast %85 : vector<16xf32> to vector<16x1xf32>
    %87 = vector.broadcast %86 : vector<16x1xf32> to vector<16x16xf32>
    %88 = arith.subf %84, %87 : vector<16x16xf32>
    %89 = math.exp %88 : vector<16x16xf32>
    %cst_32 = arith.constant dense<0.000000e+00> : vector<16xf32>
    %90 = vector.multi_reduction <add>, %89, %cst_32 [1] : vector<16x16xf32> to vector<16xf32>
    %91 = vector.shape_cast %90 : vector<16xf32> to vector<16x1xf32>
    %92 = tpu.reciprocal %91 {approx = true} : vector<16x1xf32> -> vector<16x1xf32>
    %93 = vector.broadcast %92 : vector<16x1xf32> to vector<16x16xf32>
    %94 = arith.mulf %89, %93 : vector<16x16xf32>
    %95 = arith.truncf %94 : vector<16x16xf32> to vector<16x16xbf16>
    %cst_33 = arith.constant dense<0.000000e+00> : vector<16x8xf32>
    %96 = tpu.matmul %95, %83, %cst_33 {dimension_numbers = #tpu.dot_dimension_numbers<[1], [0], [0], [1], [0, 0, 1, 1], [], []>} : vector<16x16xbf16>, vector<16x8xbf16>, vector<16x8xf32> -> vector<16x8xf32>
    %c0_34 = arith.constant 0 : index
    %c16 = arith.constant 16 : index
    %97 = vector.load %arg16[%c0_34, %c16] : memref<16x32xf32, #tpu.memory_space<vmem>>, vector<16x8xf32>
    tpu.vector_store %arg16[%c0_34, %c16], %96 {strides = array<i32>} : memref<16x32xf32, #tpu.memory_space<vmem>>, vector<16x8xf32>,
    %98 = vector.extract_strided_slice %34 {offsets = [0, 24], sizes = [16, 8], strides = [1, 1]} : vector<16x32xf32> to vector<16x8xf32>
    %99 = arith.truncf %98 : vector<16x8xf32> to vector<16x8xbf16>
    %100 = vector.extract_strided_slice %35 {offsets = [0, 24], sizes = [16, 8], strides = [1, 1]} : vector<16x32xf32> to vector<16x8xf32>
    %101 = arith.truncf %100 : vector<16x8xf32> to vector<16x8xbf16>
    %102 = vector.extract_strided_slice %37 {offsets = [0, 24], sizes = [16, 8], strides = [1, 1]} : vector<16x32xf32> to vector<16x8xf32>
    %103 = arith.truncf %102 : vector<16x8xf32> to vector<16x8xbf16>
    %cst_35 = arith.constant dense<0.000000e+00> : vector<16x16xf32>
    %104 = tpu.matmul %99, %101, %cst_35 {dimension_numbers = #tpu.dot_dimension_numbers<[1], [1], [0], [0], [0, 0, 1, 0], [], []>} : vector<16x8xbf16>, vector<16x8xbf16>, vector<16x16xf32> -> vector<16x16xf32>
    %cst_36 = arith.constant dense<0xFF800000> : vector<16xf32>
    %105 = vector.multi_reduction <maximumf>, %104, %cst_36 [1] : vector<16x16xf32> to vector<16xf32>
    %106 = vector.shape_cast %105 : vector<16xf32> to vector<16x1xf32>
    %107 = vector.broadcast %106 : vector<16x1xf32> to vector<16x16xf32>
    %108 = arith.subf %104, %107 : vector<16x16xf32>
    %109 = math.exp %108 : vector<16x16xf32>
    %cst_37 = arith.constant dense<0.000000e+00> : vector<16xf32>
    %110 = vector.multi_reduction <add>, %109, %cst_37 [1] : vector<16x16xf32> to vector<16xf32>
    %111 = vector.shape_cast %110 : vector<16xf32> to vector<16x1xf32>
    %112 = tpu.reciprocal %111 {approx = true} : vector<16x1xf32> -> vector<16x1xf32>
    %113 = vector.broadcast %112 : vector<16x1xf32> to vector<16x16xf32>
    %114 = arith.mulf %109, %113 : vector<16x16xf32>
    %115 = arith.truncf %114 : vector<16x16xf32> to vector<16x16xbf16>
    %cst_38 = arith.constant dense<0.000000e+00> : vector<16x8xf32>
    %116 = tpu.matmul %115, %103, %cst_38 {dimension_numbers = #tpu.dot_dimension_numbers<[1], [0], [0], [1], [0, 0, 1, 1], [], []>} : vector<16x16xbf16>, vector<16x8xbf16>, vector<16x8xf32> -> vector<16x8xf32>
    %c0_39 = arith.constant 0 : index
    %c24 = arith.constant 24 : index
    %117 = vector.load %arg16[%c0_39, %c24] : memref<16x32xf32, #tpu.memory_space<vmem>>, vector<16x8xf32>
    tpu.vector_store %arg16[%c0_39, %c24], %116 {strides = array<i32>} : memref<16x32xf32, #tpu.memory_space<vmem>>, vector<16x8xf32>,
    %c0_40 = arith.constant 0 : index
    %c0_41 = arith.constant 0 : index
    %118 = vector.load %arg16[%c0_40, %c0_41] : memref<16x32xf32, #tpu.memory_space<vmem>>, vector<16x32xf32>
    %119 = arith.truncf %118 : vector<16x32xf32> to vector<16x32xbf16>
    %c0_42 = arith.constant 0 : index
    %c0_43 = arith.constant 0 : index
    %120 = vector.load %arg7[%c0_42, %c0_43] : memref<32x32xbf16, #tpu.memory_space<vmem>>, vector<32x32xbf16>
    %cst_44 = arith.constant dense<0.000000e+00> : vector<16x32xf32>
    %121 = tpu.matmul %119, %120, %cst_44 {dimension_numbers = #tpu.dot_dimension_numbers<[1], [0], [0], [1], [0, 0, 1, 1], [], []>} : vector<16x32xbf16>, vector<32x32xbf16>, vector<16x32xf32> -> vector<16x32xf32>
    %c0_45 = arith.constant 0 : index
    %c0_46 = arith.constant 0 : index
    %122 = vector.load %arg8[%c0_45, %c0_46] : memref<1x32xf32, #tpu.memory_space<vmem>>, vector<1x32xf32>
    %123 = vector.broadcast %122 : vector<1x32xf32> to vector<16x32xf32>
    %124 = arith.addf %121, %123 : vector<16x32xf32>
    %125 = arith.addf %124, %1 : vector<16x32xf32>
    %c0_47 = arith.constant 0 : index
    %c0_48 = arith.constant 0 : index
    %126 = vector.load %arg9[%c0_47, %c0_48] : memref<1x32xf32, #tpu.memory_space<vmem>>, vector<1x32xf32>
    %c0_49 = arith.constant 0 : index
    %c0_50 = arith.constant 0 : index
    %127 = vector.load %arg10[%c0_49, %c0_50] : memref<1x32xf32, #tpu.memory_space<vmem>>, vector<1x32xf32>
    %cst_51 = arith.constant dense<0.000000e+00> : vector<16xf32>
    %128 = vector.multi_reduction <add>, %125, %cst_51 [1] : vector<16x32xf32> to vector<16xf32>
    %129 = vector.shape_cast %128 : vector<16xf32> to vector<16x1xf32>
    %cst_52 = arith.constant 3.200000e+01 : f32
    %130 = vector.broadcast %cst_52 : f32 to vector<16x1xf32>
    %131 = arith.divf %129, %130 : vector<16x1xf32>
    %132 = vector.broadcast %131 : vector<16x1xf32> to vector<16x32xf32>
    %133 = arith.subf %125, %132 : vector<16x32xf32>
    %134 = arith.mulf %133, %133 : vector<16x32xf32>
    %cst_53 = arith.constant dense<0.000000e+00> : vector<16xf32>
    %135 = vector.multi_reduction <add>, %134, %cst_53 [1] : vector<16x32xf32> to vector<16xf32>
    %136 = vector.shape_cast %135 : vector<16xf32> to vector<16x1xf32>
    %cst_54 = arith.constant 3.200000e+01 : f32
    %137 = vector.broadcast %cst_54 : f32 to vector<16x1xf32>
    %138 = arith.divf %136, %137 : vector<16x1xf32>
    %cst_55 = arith.constant 9.99999997E-7 : f32
    %139 = vector.broadcast %cst_55 : f32 to vector<16x1xf32>
    %140 = arith.addf %138, %139 : vector<16x1xf32>
    %141 = math.rsqrt %140 : vector<16x1xf32>
    %142 = vector.broadcast %141 : vector<16x1xf32> to vector<16x32xf32>
    %143 = arith.mulf %133, %142 : vector<16x32xf32>
    %144 = vector.broadcast %126 : vector<1x32xf32> to vector<16x32xf32>
    %145 = arith.mulf %143, %144 : vector<16x32xf32>
    %146 = vector.broadcast %127 : vector<1x32xf32> to vector<16x32xf32>
    %147 = arith.addf %145, %146 : vector<16x32xf32>
    %148 = arith.truncf %147 : vector<16x32xf32> to vector<16x32xbf16>
    %c0_56 = arith.constant 0 : index
    %c0_57 = arith.constant 0 : index
    %149 = vector.load %arg11[%c0_56, %c0_57] : memref<32x64xbf16, #tpu.memory_space<vmem>>, vector<32x64xbf16>
    %cst_58 = arith.constant dense<0.000000e+00> : vector<16x64xf32>
    %150 = tpu.matmul %148, %149, %cst_58 {dimension_numbers = #tpu.dot_dimension_numbers<[1], [0], [0], [1], [0, 0, 1, 1], [], []>} : vector<16x32xbf16>, vector<32x64xbf16>, vector<16x64xf32> -> vector<16x64xf32>
    %c0_59 = arith.constant 0 : index
    %c0_60 = arith.constant 0 : index
    %151 = vector.load %arg12[%c0_59, %c0_60] : memref<1x64xf32, #tpu.memory_space<vmem>>, vector<1x64xf32>
    %152 = vector.broadcast %151 : vector<1x64xf32> to vector<16x64xf32>
    %153 = arith.addf %150, %152 : vector<16x64xf32>
    %cst_61 = arith.constant 5.000000e-01 : f32
    %154 = vector.broadcast %cst_61 : f32 to vector<16x64xf32>
    %155 = arith.mulf %154, %153 : vector<16x64xf32>
    %cst_62 = arith.constant 0.707106769 : f32
    %156 = vector.broadcast %cst_62 : f32 to vector<16x64xf32>
    %157 = arith.mulf %153, %156 : vector<16x64xf32>
    %158 = math.erf %157 : vector<16x64xf32>
    %cst_63 = arith.constant 1.000000e+00 : f32
    %159 = vector.broadcast %cst_63 : f32 to vector<16x64xf32>
    %160 = arith.addf %159, %158 : vector<16x64xf32>
    %161 = arith.mulf %155, %160 : vector<16x64xf32>
    %162 = arith.truncf %161 : vector<16x64xf32> to vector<16x64xbf16>
    %c0_64 = arith.constant 0 : index
    %c0_65 = arith.constant 0 : index
    %163 = vector.load %arg13[%c0_64, %c0_65] : memref<64x32xbf16, #tpu.memory_space<vmem>>, vector<64x32xbf16>
    %cst_66 = arith.constant dense<0.000000e+00> : vector<16x32xf32>
    %164 = tpu.matmul %162, %163, %cst_66 {dimension_numbers = #tpu.dot_dimension_numbers<[1], [0], [0], [1], [0, 0, 1, 1], [], []>} : vector<16x64xbf16>, vector<64x32xbf16>, vector<16x32xf32> -> vector<16x32xf32>
    %c0_67 = arith.constant 0 : index
    %c0_68 = arith.constant 0 : index
    %165 = vector.load %arg14[%c0_67, %c0_68] : memref<1x32xf32, #tpu.memory_space<vmem>>, vector<1x32xf32>
    %166 = vector.broadcast %165 : vector<1x32xf32> to vector<16x32xf32>
    %167 = arith.addf %164, %166 : vector<16x32xf32>
    %168 = arith.addf %167, %125 : vector<16x32xf32>
    %c0_69 = arith.constant 0 : index
    %c0_70 = arith.constant 0 : index
    %c0_71 = arith.constant 0 : index
    %169 = vector.load %arg15[%c0_69, %c0_70, %c0_71] : memref<1x16x32xf32, #tpu.memory_space<vmem>>, vector<1x16x32xf32>
    %170 = vector.shape_cast %169 : vector<1x16x32xf32> to vector<16x32xf32>
    %171 = vector.shape_cast %168 : vector<16x32xf32> to vector<1x16x32xf32>
    tpu.vector_store %arg15[%c0_69, %c0_70, %c0_71], %171 {strides = array<i32>} : memref<1x16x32xf32, #tpu.memory_space<vmem>>, vector<1x16x32xf32>,
    return
  }
  func.func @transform_0(%arg0: i32) -> (i32, i32, i32) {
    %c0_i32 = arith.constant 0 : i32
    %c0_i32_0 = arith.constant 0 : i32
    %c0_i32_1 = arith.constant 0 : i32
    return %arg0, %c0_i32, %c0_i32_0 : i32, i32, i32
  }
  func.func @transform_1(%arg0: i32) -> (i32, i32, i32) {
    %c0_i32 = arith.constant 0 : i32
    %c0_i32_0 = arith.constant 0 : i32
    %c0_i32_1 = arith.constant 0 : i32
    return %arg0, %c0_i32, %c0_i32_0 : i32, i32, i32
  }
  func.func @transform_2(%arg0: i32) -> (i32, i32) {
    %c0_i32 = arith.constant 0 : i32
    %c0_i32_0 = arith.constant 0 : i32
    %c0_i32_1 = arith.constant 0 : i32
    return %c0_i32, %c0_i32_0 : i32, i32
  }
  func.func @transform_3(%arg0: i32) -> (i32, i32) {
    %c0_i32 = arith.constant 0 : i32
    %c0_i32_0 = arith.constant 0 : i32
    %c0_i32_1 = arith.constant 0 : i32
    return %c0_i32, %c0_i32_0 : i32, i32
  }
  func.func @transform_4(%arg0: i32) -> (i32, i32) {
    %c0_i32 = arith.constant 0 : i32
    %c0_i32_0 = arith.constant 0 : i32
    %c0_i32_1 = arith.constant 0 : i32
    return %c0_i32, %c0_i32_0 : i32, i32
  }
  func.func @transform_5(%arg0: i32) -> (i32, i32) {
    %c0_i32 = arith.constant 0 : i32
    %c0_i32_0 = arith.constant 0 : i32
    %c0_i32_1 = arith.constant 0 : i32
    return %c0_i32, %c0_i32_0 : i32, i32
  }
  func.func @transform_6(%arg0: i32) -> (i32, i32) {
    %c0_i32 = arith.constant 0 : i32
    %c0_i32_0 = arith.constant 0 : i32
    %c0_i32_1 = arith.constant 0 : i32
    return %c0_i32, %c0_i32_0 : i32, i32
  }
  func.func @transform_7(%arg0: i32) -> (i32, i32) {
    %c0_i32 = arith.constant 0 : i32
    %c0_i32_0 = arith.constant 0 : i32
    %c0_i32_1 = arith.constant 0 : i32
    return %c0_i32, %c0_i32_0 : i32, i32
  }
  func.func @transform_8(%arg0: i32) -> (i32, i32) {
    %c0_i32 = arith.constant 0 : i32
    %c0_i32_0 = arith.constant 0 : i32
    %c0_i32_1 = arith.constant 0 : i32
    return %c0_i32, %c0_i32_0 : i32, i32
  }
  func.func @transform_9(%arg0: i32) -> (i32, i32) {
    %c0_i32 = arith.constant 0 : i32
    %c0_i32_0 = arith.constant 0 : i32
    %c0_i32_1 = arith.constant 0 : i32
    return %c0_i32, %c0_i32_0 : i32, i32
  }
  func.func @transform_10(%arg0: i32) -> (i32, i32) {
    %c0_i32 = arith.constant 0 : i32
    %c0_i32_0 = arith.constant 0 : i32
    %c0_i32_1 = arith.constant 0 : i32
    return %c0_i32, %c0_i32_0 : i32, i32
  }
  func.func @transform_11(%arg0: i32) -> (i32, i32) {
    %c0_i32 = arith.constant 0 : i32
    %c0_i32_0 = arith.constant 0 : i32
    %c0_i32_1 = arith.constant 0 : i32
    return %c0_i32, %c0_i32_0 : i32, i32
  }
  func.func @transform_12(%arg0: i32) -> (i32, i32) {
    %c0_i32 = arith.constant 0 : i32
    %c0_i32_0 = arith.constant 0 : i32
    %c0_i32_1 = arith.constant 0 : i32
    return %c0_i32, %c0_i32_0 : i32, i32
  }
  func.func @transform_13(%arg0: i32) -> (i32, i32) {
    %c0_i32 = arith.constant 0 : i32
    %c0_i32_0 = arith.constant 0 : i32
    %c0_i32_1 = arith.constant 0 : i32
    return %c0_i32, %c0_i32_0 : i32, i32
  }
  func.func @transform_14(%arg0: i32) -> (i32, i32, i32) {
    %c0_i32 = arith.constant 0 : i32
    %c0_i32_0 = arith.constant 0 : i32
    %c0_i32_1 = arith.constant 0 : i32
    return %arg0, %c0_i32, %c0_i32_0 : i32, i32, i32
  }
}

</mosaic_0001>

<llo_original>
// kernel: tpu_custom_call.1
$region0: #{tpu_custom_call.1}
  #allocation0 [shape = 'u32[]', space=smem, size = 0x4, offset = 0x4, fixed_abs, tag = 'smem constant byte address 0x4 - core index']
  #allocation1 [shape = 'u32[144,128]{1,0:T(1,128)}', space=vmem, size = 0x12000, scoped, tag = 'internal scratch']
  #allocation2 [shape = 'f32[16,32]{1,0:T(8,128)}', space=vmem, size = 0x2000, scoped, tag = 'scratch operand']
  %s0 = inlined_call_operand.vmem [shape: f32[2,16,32], index: 0, kind: input, shape index: {}]
  %s1 = inlined_call_operand.hbm [shape: f32[2,16,32], index: 1, kind: input, shape index: {}]
  %s2 = inlined_call_operand.vmem [shape: f32[1,32], index: 2, kind: input, shape index: {}]
  %s3 = inlined_call_operand.vmem [shape: f32[1,32], index: 3, kind: input, shape index: {}]
  %s4 = inlined_call_operand.vmem [shape: bf16[32,96], index: 4, kind: input, shape index: {}]
  %s5 = inlined_call_operand.hbm [shape: f32[1,96], index: 5, kind: input, shape index: {}]
  %s6 = inlined_call_operand.hbm [shape: bf16[32,32], index: 6, kind: input, shape index: {}]
  %s7 = inlined_call_operand.hbm [shape: f32[1,32], index: 7, kind: input, shape index: {}]
  %s8 = inlined_call_operand.hbm [shape: f32[1,32], index: 8, kind: input, shape index: {}]
  %s9 = inlined_call_operand.hbm [shape: f32[1,32], index: 9, kind: input, shape index: {}]
  %s10 = inlined_call_operand.vmem [shape: bf16[32,64], index: 10, kind: input, shape index: {}]
  %s11 = inlined_call_operand.vmem [shape: f32[1,64], index: 11, kind: input, shape index: {}]
  %s12 = inlined_call_operand.vmem [shape: bf16[64,32], index: 12, kind: input, shape index: {}]
  %s13 = inlined_call_operand.vmem [shape: f32[1,32], index: 13, kind: input, shape index: {}]
  %s14 = inlined_call_operand.hbm [shape: f32[2,16,32], index: 14, kind: output, shape index: {}]
  %s15 = sld [smem:[#allocation0]]
  $region113: #{tpu_custom_call.1} parent=0
    _
  %s17 = ssub.s32 1, %s15
  %s18 = scalar_select 0, %s17, %s15
  $region1: #{tpu_custom_call.1} parent=0
    #allocation3 [shape = 'u8[16384]{0}', space=vmem, size = 0x4000, scoped, tag = 'input window, operand 1']
    #allocation4 [shape = 's32[2]{0}', space=sflag, size = 0x8, scoped, tag = 'scoped memory for tpu_custom_call.1']
    #allocation5 [shape = 's32[2]{0}', space=sflag, size = 0x8, scoped, tag = 'scoped memory for tpu_custom_call.1']
    #allocation6 [shape = 'u8[512]{0}', space=vmem, size = 0x400, scoped, tag = 'input window, operand 5, single buffered']
    #allocation7 [shape = 's32[1]{0}', space=sflag, size = 0x4, scoped, tag = 'scoped memory for tpu_custom_call.1']
    #allocation8 [shape = 'u8[8192]{0}', space=vmem, size = 0x2000, scoped, tag = 'input window, operand 6, single buffered']
    #allocation9 [shape = 'u8[512]{0}', space=vmem, size = 0x400, scoped, tag = 'input window, operand 7, single buffered']
    #allocation10 [shape = 's32[1]{0}', space=sflag, size = 0x4, scoped, tag = 'scoped memory for tpu_custom_call.1']
    #allocation11 [shape = 'u8[512]{0}', space=vmem, size = 0x400, scoped, tag = 'input window, operand 8, single buffered']
    #allocation12 [shape = 'u8[512]{0}', space=vmem, size = 0x400, scoped, tag = 'input window, operand 9, single buffered']
    #allocation13 [shape = 's32[1]{0}', space=sflag, size = 0x4, scoped, tag = 'scoped memory for tpu_custom_call.1']
    #allocation14 [shape = 'u8[16384]{0}', space=vmem, size = 0x4000, scoped, tag = 'output window, operand 0']
    %19 = vsyncpa [#allocation4], 0
    %s20 = scalar_lea.sflag [#allocation4], 1
    %21 = vsyncpa %s20, 0
    %22 = vsyncpa [#allocation7], 0
    %23 = vsyncpa [#allocation10], 0
    %24 = vsyncpa [#allocation13], 0
    %25 = vsyncpa [#allocation5], 0
    %s26 = scalar_lea.sflag [#allocation5], 1
    %27 = vsyncpa %s26, 0
    loop: start=0, step=1, limit=4
    $region2: #{tpu_custom_call.1} parent=1 // loop_pre_header
      _
    $region3: #{tpu_custom_call.1} parent=1 // loop_header
      %s29 = sphi 0, %s33
      %p30 = scmp.ge.s32.totalorder %s29, 4
      %s39 = sphi 0, %s41
      %s42 = sphi 0, %s39
      %s43 = sphi 0, %s42
      %s59 = sphi 0, %s43
      %s65 = sphi 0, %s67
      %s68 = sphi 0, %s65
      %s69 = sphi 0, %s68
      %s85 = sphi 0, %s69
      %s89 = sphi 0, %s89
      %s91 = sphi 0, %s89
      %s92 = sphi 0, %s91
      %s106 = sphi 0, %s92
      %s110 = sphi 0, %s110
      %s112 = sphi 0, %s110
      %s113 = sphi 0, %s112
      %s127 = sphi 0, %s113
      %s131 = sphi 0, %s131
      %s133 = sphi 0, %s131
      %s134 = sphi 0, %s133
      %s148 = sphi 0, %s134
      %s152 = sphi 0, %s152
      %s154 = sphi 0, %s152
      %s155 = sphi 0, %s154
      %s169 = sphi 0, %s155
      %s173 = sphi 0, %s173
      %s175 = sphi 0, %s173
      %s176 = sphi 0, %s175
      %s190 = sphi 0, %s176
      %s194 = sphi 0, %s194
      %s196 = sphi 0, %s194
      %s197 = sphi 0, %s196
      %s211 = sphi 0, %s197
      %s215 = sphi 0, %s215
      %s217 = sphi 0, %s215
      %s218 = sphi 0, %s217
      %s232 = sphi 0, %s218
      %s236 = sphi 0, %s236
      %s238 = sphi 0, %s236
      %s239 = sphi 0, %s238
      %s253 = sphi 0, %s239
      %s257 = sphi 0, %s257
      %s259 = sphi 0, %s257
      %s260 = sphi 0, %s259
      %s274 = sphi 0, %s260
      %s278 = sphi 0, %s278
      %s280 = sphi 0, %s278
      %s281 = sphi 0, %s280
      %s295 = sphi 0, %s281
      %s299 = sphi 0, %s299
      %s301 = sphi 0, %s299
      %s302 = sphi 0, %s301
      %s316 = sphi 0, %s302
      %s320 = sphi 0, %s320
      %s322 = sphi 0, %s320
      %s323 = sphi 0, %s322
      %s337 = sphi 0, %s323
      %s343 = sphi 0, %s345
      %s346 = sphi 0, %s343
      %s347 = sphi 0, %s346
      %s363 = sphi 0, %s347
    $region4: #{tpu_custom_call.1} parent=1 // loop_header_branch
      %32 = sbr.rel (%p30) target = $region8
    $region5: #{tpu_custom_call.1} parent=1 // loop_body
      %s34 = ssub.s32 %s29, 1
      %s35 = ssub.s32 %s29, 2
      %s36 = sadd.s32 %s29, 1
      %s37 = ssub.s32 %s29, %s36
      %p38 = scmp.eq.s32.totalorder %s37, 0
      %s40 = sadd.s32 %s39, 1
      %s41 = scalar_select %p38, %s39, %s40
      %p44 = pneg %p38
      %p45 = scmp.eq.s32.totalorder %s29, 1
      %p46 = por %p44, %p45
      %p47 = scmp.ne.s32.totalorder %s39, %s42
      %p48 = scmp.eq.s32.totalorder %s29, 0
      %p49 = por %p47, %p48
      %p50 = scmp.ne.s32.totalorder %s39, %s42
      %p51 = scmp.eq.s32.totalorder %s34, 1
      %p52 = por %p50, %p51
      %p53 = scmp.ne.s32.totalorder %s42, %s43
      %p54 = scmp.eq.s32.totalorder %s34, 0
      %p55 = por %p53, %p54
      %p56 = scmp.ne.s32.totalorder %s42, %s43
      %p57 = scmp.eq.s32.totalorder %s35, 1
      %p58 = por %p56, %p57
      %p60 = scmp.ne.s32.totalorder %s43, %s59
      %p61 = scmp.eq.s32.totalorder %s35, 0
      %p62 = por %p60, %p61
      %s63 = ssub.s32 %s29, %s36
      %p64 = scmp.eq.s32.totalorder %s63, 0
      %s66 = sadd.s32 %s65, 1
      %s67 = scalar_select %p64, %s65, %s66
      %p70 = pneg %p64
      %p71 = scmp.eq.s32.totalorder %s29, 1
      %p72 = por %p70, %p71
      %p73 = scmp.ne.s32.totalorder %s65, %s68
      %p74 = scmp.eq.s32.totalorder %s29, 0
      %p75 = por %p73, %p74
      %p76 = scmp.ne.s32.totalorder %s65, %s68
      %p77 = scmp.eq.s32.totalorder %s34, 1
      %p78 = por %p76, %p77
      %p79 = scmp.ne.s32.totalorder %s68, %s69
      %p80 = scmp.eq.s32.totalorder %s34, 0
      %p81 = por %p79, %p80
      %p82 = scmp.ne.s32.totalorder %s68, %s69
      %p83 = scmp.eq.s32.totalorder %s35, 1
      %p84 = por %p82, %p83
      %p86 = scmp.ne.s32.totalorder %s69, %s85
      %p87 = scmp.eq.s32.totalorder %s35, 0
      %p88 = por %p86, %p87
      %s90 = sadd.s32 %s89, 1
      %p93 = scmp.eq.s32.totalorder %s29, 1
      %p94 = scmp.ne.s32.totalorder %s89, %s91
      %p95 = scmp.eq.s32.totalorder %s29, 0
      %p96 = por %p94, %p95
      %p97 = scmp.ne.s32.totalorder %s89, %s91
      %p98 = scmp.eq.s32.totalorder %s34, 1
      %p99 = por %p97, %p98
      %p100 = scmp.ne.s32.totalorder %s91, %s92
      %p101 = scmp.eq.s32.totalorder %s34, 0
      %p102 = por %p100, %p101
      %p103 = scmp.ne.s32.totalorder %s91, %s92
      %p104 = scmp.eq.s32.totalorder %s35, 1
      %p105 = por %p103, %p104
      %p107 = scmp.ne.s32.totalorder %s92, %s106
      %p108 = scmp.eq.s32.totalorder %s35, 0
      %p109 = por %p107, %p108
      %s111 = sadd.s32 %s110, 1
      %p114 = scmp.eq.s32.totalorder %s29, 1
      %p115 = scmp.ne.s32.totalorder %s110, %s112
      %p116 = scmp.eq.s32.totalorder %s29, 0
      %p117 = por %p115, %p116
      %p118 = scmp.ne.s32.totalorder %s110, %s112
      %p119 = scmp.eq.s32.totalorder %s34, 1
      %p120 = por %p118, %p119
      %p121 = scmp.ne.s32.totalorder %s112, %s113
      %p122 = scmp.eq.s32.totalorder %s34, 0
      %p123 = por %p121, %p122
      %p124 = scmp.ne.s32.totalorder %s112, %s113
      %p125 = scmp.eq.s32.totalorder %s35, 1
      %p126 = por %p124, %p125
      %p128 = scmp.ne.s32.totalorder %s113, %s127
      %p129 = scmp.eq.s32.totalorder %s35, 0
      %p130 = por %p128, %p129
      %s132 = sadd.s32 %s131, 1
      %p135 = scmp.eq.s32.totalorder %s29, 1
      %p136 = scmp.ne.s32.totalorder %s131, %s133
      %p137 = scmp.eq.s32.totalorder %s29, 0
      %p138 = por %p136, %p137
      %p139 = scmp.ne.s32.totalorder %s131, %s133
      %p140 = scmp.eq.s32.totalorder %s34, 1
      %p141 = por %p139, %p140
      %p142 = scmp.ne.s32.totalorder %s133, %s134
      %p143 = scmp.eq.s32.totalorder %s34, 0
      %p144 = por %p142, %p143
      %p145 = scmp.ne.s32.totalorder %s133, %s134
      %p146 = scmp.eq.s32.totalorder %s35, 1
      %p147 = por %p145, %p146
      %p149 = scmp.ne.s32.totalorder %s134, %s148
      %p150 = scmp.eq.s32.totalorder %s35, 0
      %p151 = por %p149, %p150
      %s153 = sadd.s32 %s152, 1
      %p156 = scmp.eq.s32.totalorder %s29, 1
      %p157 = scmp.ne.s32.totalorder %s152, %s154
      %p158 = scmp.eq.s32.totalorder %s29, 0
      %p159 = por %p157, %p158
      %p160 = scmp.ne.s32.totalorder %s152, %s154
      %p161 = scmp.eq.s32.totalorder %s34, 1
      %p162 = por %p160, %p161
      %p163 = scmp.ne.s32.totalorder %s154, %s155
      %p164 = scmp.eq.s32.totalorder %s34, 0
      %p165 = por %p163, %p164
      %p166 = scmp.ne.s32.totalorder %s154, %s155
      %p167 = scmp.eq.s32.totalorder %s35, 1
      %p168 = por %p166, %p167
      %p170 = scmp.ne.s32.totalorder %s155, %s169
      %p171 = scmp.eq.s32.totalorder %s35, 0
      %p172 = por %p170, %p171
      %s174 = sadd.s32 %s173, 1
      %p177 = scmp.eq.s32.totalorder %s29, 1
      %p178 = scmp.ne.s32.totalorder %s173, %s175
      %p179 = scmp.eq.s32.totalorder %s29, 0
      %p180 = por %p178, %p179
      %p181 = scmp.ne.s32.totalorder %s173, %s175
      %p182 = scmp.eq.s32.totalorder %s34, 1
      %p183 = por %p181, %p182
      %p184 = scmp.ne.s32.totalorder %s175, %s176
      %p185 = scmp.eq.s32.totalorder %s34, 0
      %p186 = por %p184, %p185
      %p187 = scmp.ne.s32.totalorder %s175, %s176
      %p188 = scmp.eq.s32.totalorder %s35, 1
      %p189 = por %p187, %p188
      %p191 = scmp.ne.s32.totalorder %s176, %s190
      %p192 = scmp.eq.s32.totalorder %s35, 0
      %p193 = por %p191, %p192
      %s195 = sadd.s32 %s194, 1
      %p198 = scmp.eq.s32.totalorder %s29, 1
      %p199 = scmp.ne.s32.totalorder %s194, %s196
      %p200 = scmp.eq.s32.totalorder %s29, 0
      %p201 = por %p199, %p200
      %p202 = scmp.ne.s32.totalorder %s194, %s196
      %p203 = scmp.eq.s32.totalorder %s34, 1
      %p204 = por %p202, %p203
      %p205 = scmp.ne.s32.totalorder %s196, %s197
      %p206 = scmp.eq.s32.totalorder %s34, 0
      %p207 = por %p205, %p206
      %p208 = scmp.ne.s32.totalorder %s196, %s197
      %p209 = scmp.eq.s32.totalorder %s35, 1
      %p210 = por %p208, %p209
      %p212 = scmp.ne.s32.totalorder %s197, %s211
      %p213 = scmp.eq.s32.totalorder %s35, 0
      %p214 = por %p212, %p213
      %s216 = sadd.s32 %s215, 1
      %p219 = scmp.eq.s32.totalorder %s29, 1
      %p220 = scmp.ne.s32.totalorder %s215, %s217
      %p221 = scmp.eq.s32.totalorder %s29, 0
      %p222 = por %p220, %p221
      %p223 = scmp.ne.s32.totalorder %s215, %s217
      %p224 = scmp.eq.s32.totalorder %s34, 1
      %p225 = por %p223, %p224
      %p226 = scmp.ne.s32.totalorder %s217, %s218
      %p227 = scmp.eq.s32.totalorder %s34, 0
      %p228 = por %p226, %p227
      %p229 = scmp.ne.s32.totalorder %s217, %s218
      %p230 = scmp.eq.s32.totalorder %s35, 1
      %p231 = por %p229, %p230
      %p233 = scmp.ne.s32.totalorder %s218, %s232
      %p234 = scmp.eq.s32.totalorder %s35, 0
      %p235 = por %p233, %p234
      %s237 = sadd.s32 %s236, 1
      %p240 = scmp.eq.s32.totalorder %s29, 1
      %p241 = scmp.ne.s32.totalorder %s236, %s238
      %p242 = scmp.eq.s32.totalorder %s29, 0
      %p243 = por %p241, %p242
      %p244 = scmp.ne.s32.totalorder %s236, %s238
      %p245 = scmp.eq.s32.totalorder %s34, 1
      %p246 = por %p244, %p245
      %p247 = scmp.ne.s32.totalorder %s238, %s239
      %p248 = scmp.eq.s32.totalorder %s34, 0
      %p249 = por %p247, %p248
      %p250 = scmp.ne.s32.totalorder %s238, %s239
      %p251 = scmp.eq.s32.totalorder %s35, 1
      %p252 = por %p250, %p251
      %p254 = scmp.ne.s32.totalorder %s239, %s253
      %p255 = scmp.eq.s32.totalorder %s35, 0
      %p256 = por %p254, %p255
      %s258 = sadd.s32 %s257, 1
      %p261 = scmp.eq.s32.totalorder %s29, 1
      %p262 = scmp.ne.s32.totalorder %s257, %s259
      %p263 = scmp.eq.s32.totalorder %s29, 0
      %p264 = por %p262, %p263
      %p265 = scmp.ne.s32.totalorder %s257, %s259
      %p266 = scmp.eq.s32.totalorder %s34, 1
      %p267 = por %p265, %p266
      %p268 = scmp.ne.s32.totalorder %s259, %s260
      %p269 = scmp.eq.s32.totalorder %s34, 0
      %p270 = por %p268, %p269
      %p271 = scmp.ne.s32.totalorder %s259, %s260
      %p272 = scmp.eq.s32.totalorder %s35, 1
      %p273 = por %p271, %p272
      %p275 = scmp.ne.s32.totalorder %s260, %s274
      %p276 = scmp.eq.s32.totalorder %s35, 0
      %p277 = por %p275, %p276
      %s279 = sadd.s32 %s278, 1
      %p282 = scmp.eq.s32.totalorder %s29, 1
      %p283 = scmp.ne.s32.totalorder %s278, %s280
      %p284 = scmp.eq.s32.totalorder %s29, 0
      %p285 = por %p283, %p284
      %p286 = scmp.ne.s32.totalorder %s278, %s280
      %p287 = scmp.eq.s32.totalorder %s34, 1
      %p288 = por %p286, %p287
      %p289 = scmp.ne.s32.totalorder %s280, %s281
      %p290 = scmp.eq.s32.totalorder %s34, 0
      %p291 = por %p289, %p290
      %p292 = scmp.ne.s32.totalorder %s280, %s281
      %p293 = scmp.eq.s32.totalorder %s35, 1
      %p294 = por %p292, %p293
      %p296 = scmp.ne.s32.totalorder %s281, %s295
      %p297 = scmp.eq.s32.totalorder %s35, 0
      %p298 = por %p296, %p297
      %s300 = sadd.s32 %s299, 1
      %p303 = scmp.eq.s32.totalorder %s29, 1
      %p304 = scmp.ne.s32.totalorder %s299, %s301
      %p305 = scmp.eq.s32.totalorder %s29, 0
      %p306 = por %p304, %p305
      %p307 = scmp.ne.s32.totalorder %s299, %s301
      %p308 = scmp.eq.s32.totalorder %s34, 1
      %p309 = por %p307, %p308
      %p310 = scmp.ne.s32.totalorder %s301, %s302
      %p311 = scmp.eq.s32.totalorder %s34, 0
      %p312 = por %p310, %p311
      %p313 = scmp.ne.s32.totalorder %s301, %s302
      %p314 = scmp.eq.s32.totalorder %s35, 1
      %p315 = por %p313, %p314
      %p317 = scmp.ne.s32.totalorder %s302, %s316
      %p318 = scmp.eq.s32.totalorder %s35, 0
      %p319 = por %p317, %p318
      %s321 = sadd.s32 %s320, 1
      %p324 = scmp.eq.s32.totalorder %s29, 1
      %p325 = scmp.ne.s32.totalorder %s320, %s322
      %p326 = scmp.eq.s32.totalorder %s29, 0
      %p327 = por %p325, %p326
      %p328 = scmp.ne.s32.totalorder %s320, %s322
      %p329 = scmp.eq.s32.totalorder %s34, 1
      %p330 = por %p328, %p329
      %p331 = scmp.ne.s32.totalorder %s322, %s323
      %p332 = scmp.eq.s32.totalorder %s34, 0
      %p333 = por %p331, %p332
      %p334 = scmp.ne.s32.totalorder %s322, %s323
      %p335 = scmp.eq.s32.totalorder %s35, 1
      %p336 = por %p334, %p335
      %p338 = scmp.ne.s32.totalorder %s323, %s337
      %p339 = scmp.eq.s32.totalorder %s35, 0
      %p340 = por %p338, %p339
      %s341 = ssub.s32 %s29, %s36
      %p342 = scmp.eq.s32.totalorder %s341, 0
      %s344 = sadd.s32 %s343, 1
      %s345 = scalar_select %p342, %s343, %s344
      %p348 = pneg %p342
      %p349 = scmp.eq.s32.totalorder %s29, 1
      %p350 = por %p348, %p349
      %p351 = scmp.ne.s32.totalorder %s343, %s346
      %p352 = scmp.eq.s32.totalorder %s29, 0
      %p353 = por %p351, %p352
      %p354 = scmp.ne.s32.totalorder %s343, %s346
      %p355 = scmp.eq.s32.totalorder %s34, 1
      %p356 = por %p354, %p355
      %p357 = scmp.ne.s32.totalorder %s346, %s347
      %p358 = scmp.eq.s32.totalorder %s34, 0
      %p359 = por %p357, %p358
      %p360 = scmp.ne.s32.totalorder %s346, %s347
      %p361 = scmp.eq.s32.totalorder %s35, 1
      %p362 = por %p360, %p361
      %p364 = scmp.ne.s32.totalorder %s347, %s363
      %p365 = scmp.eq.s32.totalorder %s35, 0
      %p366 = por %p364, %p365
      %p367 = scmp.le.s32.totalorder 1, %s29
      %p368 = scmp.lt.s32.totalorder %s29, 3
      %p369 = pnand %p367, %p368
      %p370 = pneg %p369
      // Predicated region
      $region9: #{tpu_custom_call.1} parent=5 // pred_check
        _
      $region10: #{tpu_custom_call.1} parent=5 // pred_check_branch
        %372 = sbr.rel (%p369) target = $region12
      $region11: #{tpu_custom_call.1} parent=5 // pred_region
        %s373 = ssub.s32 %s29, 1
        // Predicated region
        $region13: #{tpu_custom_call.1} parent=11 // pred_check
          %p374 = pneg %p102
        $region14: #{tpu_custom_call.1} parent=11 // pred_check_branch
          %376 = sbr.rel (%p374) target = $region16
        $region15: #{tpu_custom_call.1} parent=11 // pred_region
          _
        $region16: #{tpu_custom_call.1} parent=11 // pred_fallthru
          _
        // Predicated region
        $region17: #{tpu_custom_call.1} parent=11 // pred_check
          %p377 = pneg %p123
        $region18: #{tpu_custom_call.1} parent=11 // pred_check_branch
          %379 = sbr.rel (%p377) target = $region20
        $region19: #{tpu_custom_call.1} parent=11 // pred_region
          _
        $region20: #{tpu_custom_call.1} parent=11 // pred_fallthru
          _
        // Predicated region
        $region21: #{tpu_custom_call.1} parent=11 // pred_check
          %p380 = pneg %p144
        $region22: #{tpu_custom_call.1} parent=11 // pred_check_branch
          %382 = sbr.rel (%p380) target = $region24
        $region23: #{tpu_custom_call.1} parent=11 // pred_region
          _
        $region24: #{tpu_custom_call.1} parent=11 // pred_fallthru
          _
        // Predicated region
        $region25: #{tpu_custom_call.1} parent=11 // pred_check
          %p383 = pneg %p165
        $region26: #{tpu_custom_call.1} parent=11 // pred_check_branch
          %385 = sbr.rel (%p383) target = $region28
        $region27: #{tpu_custom_call.1} parent=11 // pred_region
          %s387 = ssub.s32 16, 16
          %388 = vsyncadd [#allocation7], %s387
          %s390 = sshll.u32 [#allocation6], 4
          %s391 = int_to_ptr.vmem [resolvable:$true] %s390
          %393 = dma.hbm_to_vmem [thread:$0]  %s5, 16, %s391, [#allocation7]
        $region28: #{tpu_custom_call.1} parent=11 // pred_fallthru
          _
        // Predicated region
        $region29: #{tpu_custom_call.1} parent=11 // pred_check
          %p394 = pneg %p186
        $region30: #{tpu_custom_call.1} parent=11 // pred_check_branch
          %396 = sbr.rel (%p394) target = $region32
        $region31: #{tpu_custom_call.1} parent=11 // pred_region
          %s398 = ssub.s32 256, 256
          %399 = vsyncadd [#allocation7], %s398
          %s400 = sshll.u32 [#allocation8], 4
          %s401 = int_to_ptr.vmem [resolvable:$true] %s400
          %406 = dma.hbm_to_vmem [thread:$0]  %s6, 256, %s401, [#allocation7], 64, 64, 4
        $region32: #{tpu_custom_call.1} parent=11 // pred_fallthru
          _
        // Predicated region
        $region33: #{tpu_custom_call.1} parent=11 // pred_check
          %p407 = pneg %p207
        $region34: #{tpu_custom_call.1} parent=11 // pred_check_branch
          %409 = sbr.rel (%p407) target = $region36
        $region35: #{tpu_custom_call.1} parent=11 // pred_region
          %s411 = ssub.s32 16, 16
          %412 = vsyncadd [#allocation10], %s411
          %s414 = sshll.u32 [#allocation9], 4
          %s415 = int_to_ptr.vmem [resolvable:$true] %s414
          %417 = dma.hbm_to_vmem [thread:$0]  %s7, 16, %s415, [#allocation10]
        $region36: #{tpu_custom_call.1} parent=11 // pred_fallthru
          _
        // Predicated region
        $region37: #{tpu_custom_call.1} parent=11 // pred_check
          %p418 = pneg %p228
        $region38: #{tpu_custom_call.1} parent=11 // pred_check_branch
          %420 = sbr.rel (%p418) target = $region40
        $region39: #{tpu_custom_call.1} parent=11 // pred_region
          %s422 = ssub.s32 16, 16
          %423 = vsyncadd [#allocation10], %s422
          %s425 = sshll.u32 [#allocation11], 4
          %s426 = int_to_ptr.vmem [resolvable:$true] %s425
          %428 = dma.hbm_to_vmem [thread:$0]  %s8, 16, %s426, [#allocation10]
        $region40: #{tpu_custom_call.1} parent=11 // pred_fallthru
          _
        // Predicated region
        $region41: #{tpu_custom_call.1} parent=11 // pred_check
          %p429 = pneg %p249
        $region42: #{tpu_custom_call.1} parent=11 // pred_check_branch
          %431 = sbr.rel (%p429) target = $region44
        $region43: #{tpu_custom_call.1} parent=11 // pred_region
          %s433 = ssub.s32 16, 16
          %434 = vsyncadd [#allocation13], %s433
          %s436 = sshll.u32 [#allocation12], 4
          %s437 = int_to_ptr.vmem [resolvable:$true] %s436
          %439 = dma.hbm_to_vmem [thread:$0]  %s9, 16, %s437, [#allocation13]
        $region44: #{tpu_custom_call.1} parent=11 // pred_fallthru
          _
        // Predicated region
        $region45: #{tpu_custom_call.1} parent=11 // pred_check
          %p440 = pneg %p270
        $region46: #{tpu_custom_call.1} parent=11 // pred_check_branch
          %442 = sbr.rel (%p440) target = $region48
        $region47: #{tpu_custom_call.1} parent=11 // pred_region
          _
        $region48: #{tpu_custom_call.1} parent=11 // pred_fallthru
          _
        // Predicated region
        $region49: #{tpu_custom_call.1} parent=11 // pred_check
          %p443 = pneg %p291
        $region50: #{tpu_custom_call.1} parent=11 // pred_check_branch
          %445 = sbr.rel (%p443) target = $region52
        $region51: #{tpu_custom_call.1} parent=11 // pred_region
          _
        $region52: #{tpu_custom_call.1} parent=11 // pred_fallthru
          _
        // Predicated region
        $region53: #{tpu_custom_call.1} parent=11 // pred_check
          %p446 = pneg %p312
        $region54: #{tpu_custom_call.1} parent=11 // pred_check_branch
          %448 = sbr.rel (%p446) target = $region56
        $region55: #{tpu_custom_call.1} parent=11 // pred_region
          _
        $region56: #{tpu_custom_call.1} parent=11 // pred_fallthru
          _
        // Predicated region
        $region57: #{tpu_custom_call.1} parent=11 // pred_check
          %p449 = pneg %p333
        $region58: #{tpu_custom_call.1} parent=11 // pred_check_branch
          %451 = sbr.rel (%p449) target = $region60
        $region59: #{tpu_custom_call.1} parent=11 // pred_region
          _
        $region60: #{tpu_custom_call.1} parent=11 // pred_fallthru
          _
      $region12: #{tpu_custom_call.1} parent=5 // pred_fallthru
        _
      %p452 = scmp.lt.s32.totalorder %s29, 2
      // Predicated region
      $region61: #{tpu_custom_call.1} parent=5 // pred_check
        %p453 = pneg %p452
      $region62: #{tpu_custom_call.1} parent=5 // pred_check_branch
        %455 = sbr.rel (%p453) target = $region64
      $region63: #{tpu_custom_call.1} parent=5 // pred_region
        // Predicated region
        $region65: #{tpu_custom_call.1} parent=63 // pred_check
          %p456 = pneg %p49
        $region66: #{tpu_custom_call.1} parent=63 // pred_check_branch
          %458 = sbr.rel (%p456) target = $region68
        $region67: #{tpu_custom_call.1} parent=63 // pred_region
          %p459 = scmp.lt.s32.totalorder %s29, 1
          %s460 = scalar_select %p459, %s29, 1
          %s461 = smul.addr %s460, 2
          %s462 = smul.addr %s461, 8
          %s463 = scalar_lea.vmem %s0, %s462
        $region68: #{tpu_custom_call.1} parent=63 // pred_fallthru
          _
        // Predicated region
        $region69: #{tpu_custom_call.1} parent=63 // pred_check
          %p464 = pneg %p75
        $region70: #{tpu_custom_call.1} parent=63 // pred_check_branch
          %466 = sbr.rel (%p464) target = $region72
        $region71: #{tpu_custom_call.1} parent=63 // pred_region
          %s467 = sand.u32 %s65, 1
          %s468 = scalar_lea.sflag [#allocation4], %s467
          %s469 = sand.u32 %s65, 1
          %s470 = smul.addr %s469, 16
          %s471 = scalar_lea.vmem [#allocation3], %s470
          %s473 = ssub.s32 256, 256
          %474 = vsyncadd %s468, %s473
          %s475 = smul.addr %s29, 2
          %s476 = smul.addr %s475, 128
          %s477 = scalar_lea.hbm %s1, %s476
          %s478 = sshll.u32 %s471, 4
          %s479 = int_to_ptr.vmem [resolvable:$true] %s478
          %484 = dma.hbm_to_vmem [thread:$0]  %s477, 256, %s479, %s468, 128, 128, 8
        $region72: #{tpu_custom_call.1} parent=63 // pred_fallthru
          _
      $region64: #{tpu_custom_call.1} parent=5 // pred_fallthru
        _
      %p485 = scmp.le.s32.totalorder 1, %s29
      %p486 = scmp.lt.s32.totalorder %s29, 3
      %p487 = pnand %p485, %p486
      %p488 = pneg %p487
      // Predicated region
      $region73: #{tpu_custom_call.1} parent=5 // pred_check
        _
      $region74: #{tpu_custom_call.1} parent=5 // pred_check_branch
        %490 = sbr.rel (%p487) target = $region76
      $region75: #{tpu_custom_call.1} parent=5 // pred_region
        %s491 = ssub.s32 %s29, 1
        %s492 = sand.u32 %s68, 1
        %s493 = scalar_lea.sflag [#allocation4], %s492
        %s494 = sand.u32 %s68, 1
        %s495 = smul.addr %s494, 16
        %s496 = scalar_lea.vmem [#allocation3], %s495
        // Predicated region
        $region77: #{tpu_custom_call.1} parent=75 // pred_check
          %p497 = pneg %p81
        $region78: #{tpu_custom_call.1} parent=75 // pred_check_branch
          %499 = sbr.rel (%p497) target = $region80
        $region79: #{tpu_custom_call.1} parent=75 // pred_region
          %500 = dma.done %s493, 256
        $region80: #{tpu_custom_call.1} parent=75 // pred_fallthru
          _
        // Predicated region
        $region81: #{tpu_custom_call.1} parent=75 // pred_check
          %p501 = pneg %p165
        $region82: #{tpu_custom_call.1} parent=75 // pred_check_branch
          %503 = sbr.rel (%p501) target = $region84
        $region83: #{tpu_custom_call.1} parent=75 // pred_region
          %504 = dma.done [#allocation7], 16
        $region84: #{tpu_custom_call.1} parent=75 // pred_fallthru
          _
        // Predicated region
        $region85: #{tpu_custom_call.1} parent=75 // pred_check
          %p505 = pneg %p186
        $region86: #{tpu_custom_call.1} parent=75 // pred_check_branch
          %507 = sbr.rel (%p505) target = $region88
        $region87: #{tpu_custom_call.1} parent=75 // pred_region
          %508 = dma.done [#allocation7], 256
        $region88: #{tpu_custom_call.1} parent=75 // pred_fallthru
          _
        // Predicated region
        $region89: #{tpu_custom_call.1} parent=75 // pred_check
          %p509 = pneg %p207
        $region90: #{tpu_custom_call.1} parent=75 // pred_check_branch
          %511 = sbr.rel (%p509) target = $region92
        $region91: #{tpu_custom_call.1} parent=75 // pred_region
          %512 = dma.done [#allocation10], 16
        $region92: #{tpu_custom_call.1} parent=75 // pred_fallthru
          _
        // Predicated region
        $region93: #{tpu_custom_call.1} parent=75 // pred_check
          %p513 = pneg %p228
        $region94: #{tpu_custom_call.1} parent=75 // pred_check_branch
          %515 = sbr.rel (%p513) target = $region96
        $region95: #{tpu_custom_call.1} parent=75 // pred_region
          %516 = dma.done [#allocation10], 16
        $region96: #{tpu_custom_call.1} parent=75 // pred_fallthru
          _
        // Predicated region
        $region97: #{tpu_custom_call.1} parent=75 // pred_check
          %p517 = pneg %p249
        $region98: #{tpu_custom_call.1} parent=75 // pred_check_branch
          %519 = sbr.rel (%p517) target = $region100
        $region99: #{tpu_custom_call.1} parent=75 // pred_region
          %520 = dma.done [#allocation13], 16
        $region100: #{tpu_custom_call.1} parent=75 // pred_fallthru
          _
        %p521 = scmp.lt.s32.totalorder %s34, 1
        %s522 = scalar_select %p521, %s34, 1
        %s523 = smul.addr %s522, 2
        %s524 = smul.addr %s523, 8
        %s525 = scalar_lea.vmem %s0, %s524
        %p526 = pneg %p55
        %p527 = pneg %p52
        %s528 = sand.u32 %s68, 1
        %s529 = scalar_lea.sflag [#allocation4], %s528
        %s530 = sand.u32 %s68, 1
        %s531 = smul.addr %s530, 16
        %s532 = scalar_lea.vmem [#allocation3], %s531
        %p533 = pneg %p81
        %p534 = pneg %p78
        %p535 = pneg %p102
        %p536 = pneg %p99
        %p537 = pneg %p123
        %p538 = pneg %p120
        %p539 = pneg %p144
        %p540 = pneg %p141
        %p541 = pneg %p165
        %p542 = pneg %p162
        %p543 = pneg %p186
        %p544 = pneg %p183
        %p545 = pneg %p207
        %p546 = pneg %p204
        %p547 = pneg %p228
        %p548 = pneg %p225
        %p549 = pneg %p249
        %p550 = pneg %p246
        %p551 = pneg %p270
        %p552 = pneg %p267
        %p553 = pneg %p291
        %p554 = pneg %p288
        %p555 = pneg %p312
        %p556 = pneg %p309
        %p557 = pneg %p333
        %p558 = pneg %p330
        %p559 = pneg %p359
        %p560 = pneg %p356
        %s561 = sand.u32 %s346, 1
        %s562 = scalar_lea.sflag [#allocation5], %s561
        %s563 = sand.u32 %s346, 1
        %s564 = smul.addr %s563, 16
        %s565 = scalar_lea.vmem [#allocation14], %s564
        %p566 = scmp.lt.s32.totalorder %s34, 1
        %s567 = scalar_select %p566, %s34, 1
        %s568 = smul.addr %s567, 2
        %s569 = smul.addr %s568, 8
        %s570 = scalar_lea.vmem %s0, %s569
        %v572 = vld [vmem:[%s570] sm:$0xff]
        %v573 = vld [vmem:[%s570 + $0x8] sm:$0xff]
        %v574 = vld [vmem:[%s496] sm:$0xff]
        %v575 = vld [vmem:[%s496 + $0x8] sm:$0xff]
        %v576 = vld [vmem:[%s2] sm:$0x1]
        %v577 = vld [vmem:[%s3] sm:$0x1]
        %vm578 = vcmask 261120
        %v579 = vsel %vm578, %v572, 0.0
        %580 = vadd.xlane.f32.xlu0 %v579
        %v581 = vpop.xlane.xlu0 %580
        %v582 = vsel %vm578, %v573, 0.0
        %583 = vadd.xlane.f32.xlu0 %v582
        %v584 = vpop.xlane.xlu0 %583
        %v585 = vrcp.pop 32.0
        %v586 = vmul.f32 %v581, %v585
        %v587 = vmul.f32 %v584, %v585
        %v588 = vsub.f32 %v572, %v586
        %v589 = vsub.f32 %v573, %v587
        %v590 = vmul.f32 %v588, %v588
        %v591 = vmul.f32 %v589, %v589
        %v592 = vsel %vm578, %v590, 0.0
        %593 = vadd.xlane.f32.xlu0 %v592
        %v594 = vpop.xlane.xlu0 %593
        %v595 = vsel %vm578, %v591, 0.0
        %596 = vadd.xlane.f32.xlu0 %v595
        %v597 = vpop.xlane.xlu0 %596
        %v598 = vmul.f32 %v594, %v585
        %v599 = vmul.f32 %v597, %v585
        %v600 = vadd.f32 %v598, 1e-06
        %v601 = vadd.f32 %v599, 1e-06
        %v602 = vrsqrt.pop %v600
        %v603 = vrsqrt.pop %v601
        %v604 = vmul.f32 %v588, %v602
        %v605 = vmul.f32 %v589, %v603
        %v607 = vlaneseq
        %v608 = vshrl.u32 %v607, 7
        %v609 = vsub.s32 0, %v608
        %v610 = vrot.slane %v576, %v609
        %v612 = vmul.f32 %v604, %v610
        %v613 = vmul.f32 %v605, %v610
        %v615 = vlaneseq
        %v616 = vshrl.u32 %v615, 7
        %v617 = vsub.s32 0, %v616
        %v618 = vrot.slane %v577, %v617
        %v620 = vadd.f32 %v612, %v618
        %v621 = vadd.f32 %v613, %v618
        %v622 = vpack.c.bf16 %v621, %v620
        %v623 = vld [vmem:[%s4] sm:$0xf]
        %v624 = vld [vmem:[%s4 + $0x4] sm:$0xf]
        %v625 = vld [vmem:[%s4 + $0x8] sm:$0xf]
        %v626 = vld [vmem:[%s4 + $0xc] sm:$0xf]
        %v627 = vld [vmem:[#allocation6] sm:$0x1]
        %v629 = vlaneseq
        %v630 = vshrl.u32 %v629, 7
        %v631 = vsub.s32 0, %v630
        %v632 = vrot.slane %v627, %v631
        %v638 = vunpack.c.l.b16 %v623
        %v639 = vunpack.c.l.b16 %v624
        %v640 = vunpack.c.l.b16 %v625
        %v641 = vunpack.c.l.b16 %v626
        %v642 = vpack.c.b16 %v639, %v638
        %v643 = vpack.c.b16 %v641, %v640
        %v647 = vsel %vm578, %v622, 0
        %649 = vmatprep.subr.bf16.mxu0 0
        %650 = vmatpush1.bf16.msra.mxu0 %v642
        %651 = vmatprep.subr.bf16.mxu0 0
        %652 = vmatpush1.bf16.msra.mxu0 %v643
        %653 = vmatprep.subr.bf16.mxu0 0
        %654 = vmatpush1.bf16.msra.mxu0 0
        %655 = vmatprep.subr.bf16.mxu0 0
        %656 = vmatpush1.bf16.msra.mxu0 0
        %657 = vmatprep.subr.bf16.mxu0 0
        %658 = vmatpush1.bf16.msra.mxu0 0
        %659 = vmatprep.subr.bf16.mxu0 0
        %660 = vmatpush1.bf16.msra.mxu0 0
        %661 = vmatprep.subr.bf16.mxu0 0
        %662 = vmatpush1.bf16.msra.mxu0 0
        %663 = vmatprep.subr.bf16.mxu0 0
        %664 = vmatpush1.bf16.msra.mxu0 0
        %665 = vmatprep.subr.bf16.mxu0 0
        %666 = vmatpush1.bf16.msra.mxu0 0
        %667 = vmatprep.subr.bf16.mxu0 0
        %668 = vmatpush1.bf16.msra.mxu0 0
        %669 = vmatprep.subr.bf16.mxu0 0
        %670 = vmatpush1.bf16.msra.mxu0 0
        %671 = vmatprep.subr.bf16.mxu0 0
        %672 = vmatpush1.bf16.msra.mxu0 0
        %673 = vmatprep.subr.bf16.mxu0 0
        %674 = vmatpush1.bf16.msra.mxu0 0
        %675 = vmatprep.subr.bf16.mxu0 0
        %676 = vmatpush1.bf16.msra.mxu0 0
        %677 = vmatprep.subr.bf16.mxu0 0
        %678 = vmatpush1.bf16.msra.mxu0 0
        %679 = vmatprep.subr.bf16.mxu0 0
        %680 = vmatpush1.bf16.msra.mxu0 0
        %681 = vmatprep.mubr.bf16.mxu0 0
        %682 = vmatmul.mubr.bf16.gmra.mrb[0].mxu0 %v647
        %v683 = vpop.f32.mrb[0].mxu0
        %v684 = vadd.f32 %v632, %v683
        %v685 = vpop.f32.mrb[0].mxu0
        %v686 = vpop.f32.mrb[0].mxu0
        %v687 = vadd.f32 %v632, %v686
        %v688 = vpop.f32.mrb[0].mxu0
        %689 = vdwg.mxu0
        %v690 = vmul.f32 %v684, 0.35355338
        %v691 = vmul.f32 %v687, 0.35355338
        %694 = vrot.lane.b32.xlu0 %v574, 64
        %v695 = vpop.permute.xlu0 %694
        %696 = vrot.lane.b32.xlu0 %v575, 64
        %v697 = vpop.permute.xlu0 %696
        %v700 = vmul.f32 %v684, %v695
        %v701 = vmul.f32 %v687, %v697
        %v702 = vpack.c.bf16 %v691, %v690
        %v703 = vpack.c.bf16 %v687, %v684
        %v704 = vpack.c.bf16 %v701, %v700
        %706 = vrot.lane.b32.xlu0 %v703, 96
        %v707 = vpop.permute.xlu0 %706
        %vm708 = vcmask 64512
        %v710 = vsel %vm708, %v702, 0
        %v713 = vsel %vm708, %v707, 0
        %715 = vmatprep.subr.bf16.mxu0 0
        %716 = vmatpush1.bf16.xpose.msra.mxu0 %v713
        %717 = vmatprep.subr.bf16.mxu0 0
        %718 = vmatpush1.bf16.xpose.msra.mxu0 0
        %719 = vmatprep.subr.bf16.mxu0 0
        %720 = vmatpush1.bf16.xpose.msra.mxu0 0
        %721 = vmatprep.subr.bf16.mxu0 0
        %722 = vmatpush1.bf16.xpose.msra.mxu0 0
        %723 = vmatprep.subr.bf16.mxu0 0
        %724 = vmatpush1.bf16.xpose.msra.mxu0 0
        %725 = vmatprep.subr.bf16.mxu0 0
        %726 = vmatpush1.bf16.xpose.msra.mxu0 0
        %727 = vmatprep.subr.bf16.mxu0 0
        %728 = vmatpush1.bf16.xpose.msra.mxu0 0
        %729 = vmatprep.subr.bf16.mxu0 0
        %730 = vmatpush1.bf16.xpose.msra.mxu0 0
        %731 = vmatprep.subr.bf16.mxu0 0
        %732 = vmatpush1.bf16.xpose.msra.mxu0 0
        %733 = vmatprep.subr.bf16.mxu0 0
        %734 = vmatpush1.bf16.xpose.msra.mxu0 0
        %735 = vmatprep.subr.bf16.mxu0 0
        %736 = vmatpush1.bf16.xpose.msra.mxu0 0
        %737 = vmatprep.subr.bf16.mxu0 0
        %738 = vmatpush1.bf16.xpose.msra.mxu0 0
        %739 = vmatprep.subr.bf16.mxu0 0
        %740 = vmatpush1.bf16.xpose.msra.mxu0 0
        %741 = vmatprep.subr.bf16.mxu0 0
        %742 = vmatpush1.bf16.xpose.msra.mxu0 0
        %743 = vmatprep.subr.bf16.mxu0 0
        %744 = vmatpush1.bf16.xpose.msra.mxu0 0
        %745 = vmatprep.subr.bf16.mxu0 0
        %746 = vmatpush1.bf16.xpose.msra.mxu0 0
        %747 = vmatprep.mubr.bf16.mxu0 0
        %748 = vmatmul.mubr.bf16.gmra.mrb[0].mxu0 %v710
        %v749 = vpop.f32.mrb[0].mxu0
        %v750 = vadd.f32 0.0, %v749
        %v751 = vpop.f32.mrb[0].mxu0
        %v752 = vpop.f32.mrb[0].mxu0
        %v753 = vadd.f32 0.0, %v752
        %v754 = vpop.f32.mrb[0].mxu0
        %755 = vdwg.mxu0
        %vm756 = vcmask 130048
        %v757 = vsel %vm756, %v750, -inf
        %758 = vmax.xlane.f32.xlu0 %v757
        %v759 = vpop.xlane.xlu0 %758
        %v760 = vsel %vm756, %v753, -inf
        %761 = vmax.xlane.f32.xlu0 %v760
        %v762 = vpop.xlane.xlu0 %761
        %v763 = vsub.f32 %v750, %v759
        %v764 = vsub.f32 %v753, %v762
        %v765 = vmul.f32 %v763, 1.442695
        %v766 = vpow.pop %v765
        %v767 = vmul.f32 %v764, 1.442695
        %v768 = vpow.pop %v767
        %v769 = vsel %vm756, %v766, 0.0
        %770 = vadd.xlane.f32.xlu0 %v769
        %v771 = vpop.xlane.xlu0 %770
        %v772 = vsel %vm756, %v768, 0.0
        %773 = vadd.xlane.f32.xlu0 %v772
        %v774 = vpop.xlane.xlu0 %773
        %v775 = vrcp.pop %v771
        %v776 = vrcp.pop %v774
        %v777 = vmul.f32 %v766, %v775
        %v778 = vmul.f32 %v768, %v776
        %v779 = vpack.c.bf16 %v778, %v777
        %781 = vrot.lane.b32.xlu0 %v704, 64
        %v782 = vpop.permute.xlu0 %781
        %v785 = vsel %vm756, %v779, 0
        %787 = vmatprep.subr.bf16.mxu0 0
        %788 = vmatpush1.bf16.msra.mxu0 %v782
        %789 = vmatprep.subr.bf16.mxu0 0
        %790 = vmatpush1.bf16.msra.mxu0 0
        %791 = vmatprep.subr.bf16.mxu0 0
        %792 = vmatpush1.bf16.msra.mxu0 0
        %793 = vmatprep.subr.bf16.mxu0 0
        %794 = vmatpush1.bf16.msra.mxu0 0
        %795 = vmatprep.subr.bf16.mxu0 0
        %796 = vmatpush1.bf16.msra.mxu0 0
        %797 = vmatprep.subr.bf16.mxu0 0
        %798 = vmatpush1.bf16.msra.mxu0 0
        %799 = vmatprep.subr.bf16.mxu0 0
        %800 = vmatpush1.bf16.msra.mxu0 0
        %801 = vmatprep.subr.bf16.mxu0 0
        %802 = vmatpush1.bf16.msra.mxu0 0
        %803 = vmatprep.subr.bf16.mxu0 0
        %804 = vmatpush1.bf16.msra.mxu0 0
        %805 = vmatprep.subr.bf16.mxu0 0
        %806 = vmatpush1.bf16.msra.mxu0 0
        %807 = vmatprep.subr.bf16.mxu0 0
        %808 = vmatpush1.bf16.msra.mxu0 0
        %809 = vmatprep.subr.bf16.mxu0 0
        %810 = vmatpush1.bf16.msra.mxu0 0
        %811 = vmatprep.subr.bf16.mxu0 0
        %812 = vmatpush1.bf16.msra.mxu0 0
        %813 = vmatprep.subr.bf16.mxu0 0
        %814 = vmatpush1.bf16.msra.mxu0 0
        %815 = vmatprep.subr.bf16.mxu0 0
        %816 = vmatpush1.bf16.msra.mxu0 0
        %817 = vmatprep.subr.bf16.mxu0 0
        %818 = vmatpush1.bf16.msra.mxu0 0
        %819 = vmatprep.mubr.bf16.mxu0 0
        %820 = vmatmul.mubr.bf16.gmra.mrb[0].mxu0 %v785
        %v821 = vpop.f32.mrb[0].mxu0
        %v822 = vadd.f32 0.0, %v821
        %v823 = vpop.f32.mrb[0].mxu0
        %v824 = vpop.f32.mrb[0].mxu0
        %v825 = vadd.f32 0.0, %v824
        %v826 = vpop.f32.mrb[0].mxu0
        %827 = vdwg.mxu0
        %828 = vst.msk [vmem:[#allocation2] sm:$0xff] %vm708, %v822
        %829 = vst.msk [vmem:[#allocation2 + $0x8] sm:$0xff] %vm708, %v825
        %831 = vrot.lane.b32.xlu0 %v702, 120
        %v832 = vpop.permute.xlu0 %831
        %833 = vrot.lane.b32.xlu0 %v703, 88
        %v834 = vpop.permute.xlu0 %833
        %v836 = vsel %vm708, %v832, 0
        %v839 = vsel %vm708, %v834, 0
        %841 = vmatprep.subr.bf16.mxu0 0
        %842 = vmatpush1.bf16.xpose.msra.mxu0 %v839
        %843 = vmatprep.subr.bf16.mxu0 0
        %844 = vmatpush1.bf16.xpose.msra.mxu0 0
        %845 = vmatprep.subr.bf16.mxu0 0
        %846 = vmatpush1.bf16.xpose.msra.mxu0 0
        %847 = vmatprep.subr.bf16.mxu0 0
        %848 = vmatpush1.bf16.xpose.msra.mxu0 0
        %849 = vmatprep.subr.bf16.mxu0 0
        %850 = vmatpush1.bf16.xpose.msra.mxu0 0
        %851 = vmatprep.subr.bf16.mxu0 0
        %852 = vmatpush1.bf16.xpose.msra.mxu0 0
        %853 = vmatprep.subr.bf16.mxu0 0
        %854 = vmatpush1.bf16.xpose.msra.mxu0 0
        %855 = vmatprep.subr.bf16.mxu0 0
        %856 = vmatpush1.bf16.xpose.msra.mxu0 0
        %857 = vmatprep.subr.bf16.mxu0 0
        %858 = vmatpush1.bf16.xpose.msra.mxu0 0
        %859 = vmatprep.subr.bf16.mxu0 0
        %860 = vmatpush1.bf16.xpose.msra.mxu0 0
        %861 = vmatprep.subr.bf16.mxu0 0
        %862 = vmatpush1.bf16.xpose.msra.mxu0 0
        %863 = vmatprep.subr.bf16.mxu0 0
        %864 = vmatpush1.bf16.xpose.msra.mxu0 0
        %865 = vmatprep.subr.bf16.mxu0 0
        %866 = vmatpush1.bf16.xpose.msra.mxu0 0
        %867 = vmatprep.subr.bf16.mxu0 0
        %868 = vmatpush1.bf16.xpose.msra.mxu0 0
        %869 = vmatprep.subr.bf16.mxu0 0
        %870 = vmatpush1.bf16.xpose.msra.mxu0 0
        %871 = vmatprep.subr.bf16.mxu0 0
        %872 = vmatpush1.bf16.xpose.msra.mxu0 0
        %873 = vmatprep.mubr.bf16.mxu0 0
        %874 = vmatmul.mubr.bf16.gmra.mrb[0].mxu0 %v836
        %v875 = vpop.f32.mrb[0].mxu0
        %v876 = vadd.f32 0.0, %v875
        %v877 = vpop.f32.mrb[0].mxu0
        %v878 = vpop.f32.mrb[0].mxu0
        %v879 = vadd.f32 0.0, %v878
        %v880 = vpop.f32.mrb[0].mxu0
        %881 = vdwg.mxu0
        %v882 = vsel %vm756, %v876, -inf
        %883 = vmax.xlane.f32.xlu0 %v882
        %v884 = vpop.xlane.xlu0 %883
        %v885 = vsel %vm756, %v879, -inf
        %886 = vmax.xlane.f32.xlu0 %v885
        %v887 = vpop.xlane.xlu0 %886
        %v888 = vsub.f32 %v876, %v884
        %v889 = vsub.f32 %v879, %v887
        %v890 = vmul.f32 %v888, 1.442695
        %v891 = vpow.pop %v890
        %v892 = vmul.f32 %v889, 1.442695
        %v893 = vpow.pop %v892
        %v894 = vsel %vm756, %v891, 0.0
        %895 = vadd.xlane.f32.xlu0 %v894
        %v896 = vpop.xlane.xlu0 %895
        %v897 = vsel %vm756, %v893, 0.0
        %898 = vadd.xlane.f32.xlu0 %v897
        %v899 = vpop.xlane.xlu0 %898
        %v900 = vrcp.pop %v896
        %v901 = vrcp.pop %v899
        %v902 = vmul.f32 %v891, %v900
        %v903 = vmul.f32 %v893, %v901
        %v904 = vpack.c.bf16 %v903, %v902
        %905 = vrot.lane.b32.xlu0 %v704, 56
        %v906 = vpop.permute.xlu0 %905
        %v909 = vsel %vm756, %v904, 0
        %911 = vmatprep.subr.bf16.mxu0 0
        %912 = vmatpush1.bf16.msra.mxu0 %v906
        %913 = vmatprep.subr.bf16.mxu0 0
        %914 = vmatpush1.bf16.msra.mxu0 0
        %915 = vmatprep.subr.bf16.mxu0 0
        %916 = vmatpush1.bf16.msra.mxu0 0
        %917 = vmatprep.subr.bf16.mxu0 0
        %918 = vmatpush1.bf16.msra.mxu0 0
        %919 = vmatprep.subr.bf16.mxu0 0
        %920 = vmatpush1.bf16.msra.mxu0 0
        %921 = vmatprep.subr.bf16.mxu0 0
        %922 = vmatpush1.bf16.msra.mxu0 0
        %923 = vmatprep.subr.bf16.mxu0 0
        %924 = vmatpush1.bf16.msra.mxu0 0
        %925 = vmatprep.subr.bf16.mxu0 0
        %926 = vmatpush1.bf16.msra.mxu0 0
        %927 = vmatprep.subr.bf16.mxu0 0
        %928 = vmatpush1.bf16.msra.mxu0 0
        %929 = vmatprep.subr.bf16.mxu0 0
        %930 = vmatpush1.bf16.msra.mxu0 0
        %931 = vmatprep.subr.bf16.mxu0 0
        %932 = vmatpush1.bf16.msra.mxu0 0
        %933 = vmatprep.subr.bf16.mxu0 0
        %934 = vmatpush1.bf16.msra.mxu0 0
        %935 = vmatprep.subr.bf16.mxu0 0
        %936 = vmatpush1.bf16.msra.mxu0 0
        %937 = vmatprep.subr.bf16.mxu0 0
        %938 = vmatpush1.bf16.msra.mxu0 0
        %939 = vmatprep.subr.bf16.mxu0 0
        %940 = vmatpush1.bf16.msra.mxu0 0
        %941 = vmatprep.subr.bf16.mxu0 0
        %942 = vmatpush1.bf16.msra.mxu0 0
        %943 = vmatprep.mubr.bf16.mxu0 0
        %944 = vmatmul.mubr.bf16.gmra.mrb[0].mxu0 %v909
        %v945 = vpop.f32.mrb[0].mxu0
        %v946 = vadd.f32 0.0, %v945
        %v947 = vpop.f32.mrb[0].mxu0
        %v948 = vpop.f32.mrb[0].mxu0
        %v949 = vadd.f32 0.0, %v948
        %v950 = vpop.f32.mrb[0].mxu0
        %951 = vdwg.mxu0
        %954 = vrot.lane.b32.xlu0 %v946, 8
        %v955 = vpop.permute.xlu0 %954
        %956 = vrot.lane.b32.xlu0 %v949, 8
        %v957 = vpop.permute.xlu0 %956
        %vm960 = vcmask 130112
        %961 = vst.msk [vmem:[#allocation2] sm:$0xff] %vm960, %v955
        %962 = vst.msk [vmem:[#allocation2 + $0x8] sm:$0xff] %vm960, %v957
        %963 = vrot.lane.b32.xlu0 %v702, 112
        %v964 = vpop.permute.xlu0 %963
        %965 = vrot.lane.b32.xlu0 %v703, 80
        %v966 = vpop.permute.xlu0 %965
        %v968 = vsel %vm708, %v964, 0
        %v971 = vsel %vm708, %v966, 0
        %973 = vmatprep.subr.bf16.mxu0 0
        %974 = vmatpush1.bf16.xpose.msra.mxu0 %v971
        %975 = vmatprep.subr.bf16.mxu0 0
        %976 = vmatpush1.bf16.xpose.msra.mxu0 0
        %977 = vmatprep.subr.bf16.mxu0 0
        %978 = vmatpush1.bf16.xpose.msra.mxu0 0
        %979 = vmatprep.subr.bf16.mxu0 0
        %980 = vmatpush1.bf16.xpose.msra.mxu0 0
        %981 = vmatprep.subr.bf16.mxu0 0
        %982 = vmatpush1.bf16.xpose.msra.mxu0 0
        %983 = vmatprep.subr.bf16.mxu0 0
        %984 = vmatpush1.bf16.xpose.msra.mxu0 0
        %985 = vmatprep.subr.bf16.mxu0 0
        %986 = vmatpush1.bf16.xpose.msra.mxu0 0
        %987 = vmatprep.subr.bf16.mxu0 0
        %988 = vmatpush1.bf16.xpose.msra.mxu0 0
        %989 = vmatprep.subr.bf16.mxu0 0
        %990 = vmatpush1.bf16.xpose.msra.mxu0 0
        %991 = vmatprep.subr.bf16.mxu0 0
        %992 = vmatpush1.bf16.xpose.msra.mxu0 0
        %993 = vmatprep.subr.bf16.mxu0 0
        %994 = vmatpush1.bf16.xpose.msra.mxu0 0
        %995 = vmatprep.subr.bf16.mxu0 0
        %996 = vmatpush1.bf16.xpose.msra.mxu0 0
        %997 = vmatprep.subr.bf16.mxu0 0
        %998 = vmatpush1.bf16.xpose.msra.mxu0 0
        %999 = vmatprep.subr.bf16.mxu0 0
        %1000 = vmatpush1.bf16.xpose.msra.mxu0 0
        %1001 = vmatprep.subr.bf16.mxu0 0
        %1002 = vmatpush1.bf16.xpose.msra.mxu0 0
        %1003 = vmatprep.subr.bf16.mxu0 0
        %1004 = vmatpush1.bf16.xpose.msra.mxu0 0
        %1005 = vmatprep.mubr.bf16.mxu0 0
        %1006 = vmatmul.mubr.bf16.gmra.mrb[0].mxu0 %v968
        %v1007 = vpop.f32.mrb[0].mxu0
        %v1008 = vadd.f32 0.0, %v1007
        %v1009 = vpop.f32.mrb[0].mxu0
        %v1010 = vpop.f32.mrb[0].mxu0
        %v1011 = vadd.f32 0.0, %v1010
        %v1012 = vpop.f32.mrb[0].mxu0
        %1013 = vdwg.mxu0
        %v1014 = vsel %vm756, %v1008, -inf
        %1015 = vmax.xlane.f32.xlu0 %v1014
        %v1016 = vpop.xlane.xlu0 %1015
        %v1017 = vsel %vm756, %v1011, -inf
        %1018 = vmax.xlane.f32.xlu0 %v1017
        %v1019 = vpop.xlane.xlu0 %1018
        %v1020 = vsub.f32 %v1008, %v1016
        %v1021 = vsub.f32 %v1011, %v1019
        %v1022 = vmul.f32 %v1020, 1.442695
        %v1023 = vpow.pop %v1022
        %v1024 = vmul.f32 %v1021, 1.442695
        %v1025 = vpow.pop %v1024
        %v1026 = vsel %vm756, %v1023, 0.0
        %1027 = vadd.xlane.f32.xlu0 %v1026
        %v1028 = vpop.xlane.xlu0 %1027
        %v1029 = vsel %vm756, %v1025, 0.0
        %1030 = vadd.xlane.f32.xlu0 %v1029
        %v1031 = vpop.xlane.xlu0 %1030
        %v1032 = vrcp.pop %v1028
        %v1033 = vrcp.pop %v1031
        %v1034 = vmul.f32 %v1023, %v1032
        %v1035 = vmul.f32 %v1025, %v1033
        %v1036 = vpack.c.bf16 %v1035, %v1034
        %1037 = vrot.lane.b32.xlu0 %v704, 48
        %v1038 = vpop.permute.xlu0 %1037
        %v1041 = vsel %vm756, %v1036, 0
        %1043 = vmatprep.subr.bf16.mxu0 0
        %1044 = vmatpush1.bf16.msra.mxu0 %v1038
        %1045 = vmatprep.subr.bf16.mxu0 0
        %1046 = vmatpush1.bf16.msra.mxu0 0
        %1047 = vmatprep.subr.bf16.mxu0 0
        %1048 = vmatpush1.bf16.msra.mxu0 0
        %1049 = vmatprep.subr.bf16.mxu0 0
        %1050 = vmatpush1.bf16.msra.mxu0 0
        %1051 = vmatprep.subr.bf16.mxu0 0
        %1052 = vmatpush1.bf16.msra.mxu0 0
        %1053 = vmatprep.subr.bf16.mxu0 0
        %1054 = vmatpush1.bf16.msra.mxu0 0
        %1055 = vmatprep.subr.bf16.mxu0 0
        %1056 = vmatpush1.bf16.msra.mxu0 0
        %1057 = vmatprep.subr.bf16.mxu0 0
        %1058 = vmatpush1.bf16.msra.mxu0 0
        %1059 = vmatprep.subr.bf16.mxu0 0
        %1060 = vmatpush1.bf16.msra.mxu0 0
        %1061 = vmatprep.subr.bf16.mxu0 0
        %1062 = vmatpush1.bf16.msra.mxu0 0
        %1063 = vmatprep.subr.bf16.mxu0 0
        %1064 = vmatpush1.bf16.msra.mxu0 0
        %1065 = vmatprep.subr.bf16.mxu0 0
        %1066 = vmatpush1.bf16.msra.mxu0 0
        %1067 = vmatprep.subr.bf16.mxu0 0
        %1068 = vmatpush1.bf16.msra.mxu0 0
        %1069 = vmatprep.subr.bf16.mxu0 0
        %1070 = vmatpush1.bf16.msra.mxu0 0
        %1071 = vmatprep.subr.bf16.mxu0 0
        %1072 = vmatpush1.bf16.msra.mxu0 0
        %1073 = vmatprep.subr.bf16.mxu0 0
        %1074 = vmatpush1.bf16.msra.mxu0 0
        %1075 = vmatprep.mubr.bf16.mxu0 0
        %1076 = vmatmul.mubr.bf16.gmra.mrb[0].mxu0 %v1041
        %v1077 = vpop.f32.mrb[0].mxu0
        %v1078 = vadd.f32 0.0, %v1077
        %v1079 = vpop.f32.mrb[0].mxu0
        %v1080 = vpop.f32.mrb[0].mxu0
        %v1081 = vadd.f32 0.0, %v1080
        %v1082 = vpop.f32.mrb[0].mxu0
        %1083 = vdwg.mxu0
        %1086 = vrot.lane.b32.xlu0 %v1078, 16
        %v1087 = vpop.permute.xlu0 %1086
        %1088 = vrot.lane.b32.xlu0 %v1081, 16
        %v1089 = vpop.permute.xlu0 %1088
        %vm1092 = vcmask 195712
        %1093 = vst.msk [vmem:[#allocation2] sm:$0xff] %vm1092, %v1087
        %1094 = vst.msk [vmem:[#allocation2 + $0x8] sm:$0xff] %vm1092, %v1089
        %1095 = vrot.lane.b32.xlu0 %v702, 104
        %v1096 = vpop.permute.xlu0 %1095
        %1097 = vrot.lane.b32.xlu0 %v703, 72
        %v1098 = vpop.permute.xlu0 %1097
        %v1100 = vsel %vm708, %v1096, 0
        %v1103 = vsel %vm708, %v1098, 0
        %1105 = vmatprep.subr.bf16.mxu0 0
        %1106 = vmatpush1.bf16.xpose.msra.mxu0 %v1103
        %1107 = vmatprep.subr.bf16.mxu0 0
        %1108 = vmatpush1.bf16.xpose.msra.mxu0 0
        %1109 = vmatprep.subr.bf16.mxu0 0
        %1110 = vmatpush1.bf16.xpose.msra.mxu0 0
        %1111 = vmatprep.subr.bf16.mxu0 0
        %1112 = vmatpush1.bf16.xpose.msra.mxu0 0
        %1113 = vmatprep.subr.bf16.mxu0 0
        %1114 = vmatpush1.bf16.xpose.msra.mxu0 0
        %1115 = vmatprep.subr.bf16.mxu0 0
        %1116 = vmatpush1.bf16.xpose.msra.mxu0 0
        %1117 = vmatprep.subr.bf16.mxu0 0
        %1118 = vmatpush1.bf16.xpose.msra.mxu0 0
        %1119 = vmatprep.subr.bf16.mxu0 0
        %1120 = vmatpush1.bf16.xpose.msra.mxu0 0
        %1121 = vmatprep.subr.bf16.mxu0 0
        %1122 = vmatpush1.bf16.xpose.msra.mxu0 0
        %1123 = vmatprep.subr.bf16.mxu0 0
        %1124 = vmatpush1.bf16.xpose.msra.mxu0 0
        %1125 = vmatprep.subr.bf16.mxu0 0
        %1126 = vmatpush1.bf16.xpose.msra.mxu0 0
        %1127 = vmatprep.subr.bf16.mxu0 0
        %1128 = vmatpush1.bf16.xpose.msra.mxu0 0
        %1129 = vmatprep.subr.bf16.mxu0 0
        %1130 = vmatpush1.bf16.xpose.msra.mxu0 0
        %1131 = vmatprep.subr.bf16.mxu0 0
        %1132 = vmatpush1.bf16.xpose.msra.mxu0 0
        %1133 = vmatprep.subr.bf16.mxu0 0
        %1134 = vmatpush1.bf16.xpose.msra.mxu0 0
        %1135 = vmatprep.subr.bf16.mxu0 0
        %1136 = vmatpush1.bf16.xpose.msra.mxu0 0
        %1137 = vmatprep.mubr.bf16.mxu0 0
        %1138 = vmatmul.mubr.bf16.gmra.mrb[0].mxu0 %v1100
        %v1139 = vpop.f32.mrb[0].mxu0
        %v1140 = vadd.f32 0.0, %v1139
        %v1141 = vpop.f32.mrb[0].mxu0
        %v1142 = vpop.f32.mrb[0].mxu0
        %v1143 = vadd.f32 0.0, %v1142
        %v1144 = vpop.f32.mrb[0].mxu0
        %1145 = vdwg.mxu0
        %v1146 = vsel %vm756, %v1140, -inf
        %1147 = vmax.xlane.f32.xlu0 %v1146
        %v1148 = vpop.xlane.xlu0 %1147
        %v1149 = vsel %vm756, %v1143, -inf
        %1150 = vmax.xlane.f32.xlu0 %v1149
        %v1151 = vpop.xlane.xlu0 %1150
        %v1152 = vsub.f32 %v1140, %v1148
        %v1153 = vsub.f32 %v1143, %v1151
        %v1154 = vmul.f32 %v1152, 1.442695
        %v1155 = vpow.pop %v1154
        %v1156 = vmul.f32 %v1153, 1.442695
        %v1157 = vpow.pop %v1156
        %v1158 = vsel %vm756, %v1155, 0.0
        %1159 = vadd.xlane.f32.xlu0 %v1158
        %v1160 = vpop.xlane.xlu0 %1159
        %v1161 = vsel %vm756, %v1157, 0.0
        %1162 = vadd.xlane.f32.xlu0 %v1161
        %v1163 = vpop.xlane.xlu0 %1162
        %v1164 = vrcp.pop %v1160
        %v1165 = vrcp.pop %v1163
        %v1166 = vmul.f32 %v1155, %v1164
        %v1167 = vmul.f32 %v1157, %v1165
        %v1168 = vpack.c.bf16 %v1167, %v1166
        %1169 = vrot.lane.b32.xlu0 %v704, 40
        %v1170 = vpop.permute.xlu0 %1169
        %v1173 = vsel %vm756, %v1168, 0
        %1175 = vmatprep.subr.bf16.mxu0 0
        %1176 = vmatpush1.bf16.msra.mxu0 %v1170
        %1177 = vmatprep.subr.bf16.mxu0 0
        %1178 = vmatpush1.bf16.msra.mxu0 0
        %1179 = vmatprep.subr.bf16.mxu0 0
        %1180 = vmatpush1.bf16.msra.mxu0 0
        %1181 = vmatprep.subr.bf16.mxu0 0
        %1182 = vmatpush1.bf16.msra.mxu0 0
        %1183 = vmatprep.subr.bf16.mxu0 0
        %1184 = vmatpush1.bf16.msra.mxu0 0
        %1185 = vmatprep.subr.bf16.mxu0 0
        %1186 = vmatpush1.bf16.msra.mxu0 0
        %1187 = vmatprep.subr.bf16.mxu0 0
        %1188 = vmatpush1.bf16.msra.mxu0 0
        %1189 = vmatprep.subr.bf16.mxu0 0
        %1190 = vmatpush1.bf16.msra.mxu0 0
        %1191 = vmatprep.subr.bf16.mxu0 0
        %1192 = vmatpush1.bf16.msra.mxu0 0
        %1193 = vmatprep.subr.bf16.mxu0 0
        %1194 = vmatpush1.bf16.msra.mxu0 0
        %1195 = vmatprep.subr.bf16.mxu0 0
        %1196 = vmatpush1.bf16.msra.mxu0 0
        %1197 = vmatprep.subr.bf16.mxu0 0
        %1198 = vmatpush1.bf16.msra.mxu0 0
        %1199 = vmatprep.subr.bf16.mxu0 0
        %1200 = vmatpush1.bf16.msra.mxu0 0
        %1201 = vmatprep.subr.bf16.mxu0 0
        %1202 = vmatpush1.bf16.msra.mxu0 0
        %1203 = vmatprep.subr.bf16.mxu0 0
        %1204 = vmatpush1.bf16.msra.mxu0 0
        %1205 = vmatprep.subr.bf16.mxu0 0
        %1206 = vmatpush1.bf16.msra.mxu0 0
        %1207 = vmatprep.mubr.bf16.mxu0 0
        %1208 = vmatmul.mubr.bf16.gmra.mrb[0].mxu0 %v1173
        %v1209 = vpop.f32.mrb[0].mxu0
        %v1210 = vadd.f32 0.0, %v1209
        %v1211 = vpop.f32.mrb[0].mxu0
        %v1212 = vpop.f32.mrb[0].mxu0
        %v1213 = vadd.f32 0.0, %v1212
        %v1214 = vpop.f32.mrb[0].mxu0
        %1215 = vdwg.mxu0
        %1218 = vrot.lane.b32.xlu0 %v1210, 24
        %v1219 = vpop.permute.xlu0 %1218
        %1220 = vrot.lane.b32.xlu0 %v1213, 24
        %v1221 = vpop.permute.xlu0 %1220
        %vm1224 = vcmask 261312
        %1225 = vst.msk [vmem:[#allocation2] sm:$0xff] %vm1224, %v1219
        %1226 = vst.msk [vmem:[#allocation2 + $0x8] sm:$0xff] %vm1224, %v1221
        %v1227 = vld [vmem:[#allocation2] sm:$0xff]
        %v1228 = vld [vmem:[#allocation2 + $0x8] sm:$0xff]
        %v1229 = vpack.c.bf16 %v1228, %v1227
        %v1230 = vld [vmem:[#allocation8] sm:$0xf]
        %v1231 = vld [vmem:[#allocation8 + $0x4] sm:$0xf]
        %v1232 = vld [vmem:[#allocation8 + $0x8] sm:$0xf]
        %v1233 = vld [vmem:[#allocation8 + $0xc] sm:$0xf]
        %v1234 = vld [vmem:[#allocation9] sm:$0x1]
        %v1236 = vlaneseq
        %v1237 = vshrl.u32 %v1236, 7
        %v1238 = vsub.s32 0, %v1237
        %v1239 = vrot.slane %v1234, %v1238
        %v1245 = vunpack.c.l.b16 %v1230
        %v1246 = vunpack.c.l.b16 %v1231
        %v1247 = vunpack.c.l.b16 %v1232
        %v1248 = vunpack.c.l.b16 %v1233
        %v1249 = vpack.c.b16 %v1246, %v1245
        %v1250 = vpack.c.b16 %v1248, %v1247
        %v1254 = vsel %vm578, %v1229, 0
        %1256 = vmatprep.subr.bf16.mxu0 0
        %1257 = vmatpush1.bf16.msra.mxu0 %v1249
        %1258 = vmatprep.subr.bf16.mxu0 0
        %1259 = vmatpush1.bf16.msra.mxu0 %v1250
        %1260 = vmatprep.subr.bf16.mxu0 0
        %1261 = vmatpush1.bf16.msra.mxu0 0
        %1262 = vmatprep.subr.bf16.mxu0 0
        %1263 = vmatpush1.bf16.msra.mxu0 0
        %1264 = vmatprep.subr.bf16.mxu0 0
        %1265 = vmatpush1.bf16.msra.mxu0 0
        %1266 = vmatprep.subr.bf16.mxu0 0
        %1267 = vmatpush1.bf16.msra.mxu0 0
        %1268 = vmatprep.subr.bf16.mxu0 0
        %1269 = vmatpush1.bf16.msra.mxu0 0
        %1270 = vmatprep.subr.bf16.mxu0 0
        %1271 = vmatpush1.bf16.msra.mxu0 0
        %1272 = vmatprep.subr.bf16.mxu0 0
        %1273 = vmatpush1.bf16.msra.mxu0 0
        %1274 = vmatprep.subr.bf16.mxu0 0
        %1275 = vmatpush1.bf16.msra.mxu0 0
        %1276 = vmatprep.subr.bf16.mxu0 0
        %1277 = vmatpush1.bf16.msra.mxu0 0
        %1278 = vmatprep.subr.bf16.mxu0 0
        %1279 = vmatpush1.bf16.msra.mxu0 0
        %1280 = vmatprep.subr.bf16.mxu0 0
        %1281 = vmatpush1.bf16.msra.mxu0 0
        %1282 = vmatprep.subr.bf16.mxu0 0
        %1283 = vmatpush1.bf16.msra.mxu0 0
        %1284 = vmatprep.subr.bf16.mxu0 0
        %1285 = vmatpush1.bf16.msra.mxu0 0
        %1286 = vmatprep.subr.bf16.mxu0 0
        %1287 = vmatpush1.bf16.msra.mxu0 0
        %1288 = vmatprep.mubr.bf16.mxu0 0
        %1289 = vmatmul.mubr.bf16.gmra.mrb[0].mxu0 %v1254
        %v1290 = vpop.f32.mrb[0].mxu0
        %v1291 = vadd.f32 %v1239, %v1290
        %v1292 = vpop.f32.mrb[0].mxu0
        %v1293 = vpop.f32.mrb[0].mxu0
        %v1294 = vadd.f32 %v1239, %v1293
        %v1295 = vpop.f32.mrb[0].mxu0
        %1296 = vdwg.mxu0
        %v1297 = vadd.f32 %v1291, %v572
        %v1298 = vadd.f32 %v1294, %v573
        %v1299 = vld [vmem:[#allocation11] sm:$0x1]
        %v1300 = vld [vmem:[#allocation12] sm:$0x1]
        %v1301 = vsel %vm578, %v1297, 0.0
        %1302 = vadd.xlane.f32.xlu0 %v1301
        %v1303 = vpop.xlane.xlu0 %1302
        %v1304 = vsel %vm578, %v1298, 0.0
        %1305 = vadd.xlane.f32.xlu0 %v1304
        %v1306 = vpop.xlane.xlu0 %1305
        %v1307 = vmul.f32 %v1303, %v585
        %v1308 = vmul.f32 %v1306, %v585
        %v1309 = vsub.f32 %v1297, %v1307
        %v1310 = vsub.f32 %v1298, %v1308
        %v1311 = vmul.f32 %v1309, %v1309
        %v1312 = vmul.f32 %v1310, %v1310
        %v1313 = vsel %vm578, %v1311, 0.0
        %1314 = vadd.xlane.f32.xlu0 %v1313
        %v1315 = vpop.xlane.xlu0 %1314
        %v1316 = vsel %vm578, %v1312, 0.0
        %1317 = vadd.xlane.f32.xlu0 %v1316
        %v1318 = vpop.xlane.xlu0 %1317
        %v1319 = vmul.f32 %v1315, %v585
        %v1320 = vmul.f32 %v1318, %v585
        %v1321 = vadd.f32 %v1319, 1e-06
        %v1322 = vadd.f32 %v1320, 1e-06
        %v1323 = vrsqrt.pop %v1321
        %v1324 = vrsqrt.pop %v1322
        %v1325 = vmul.f32 %v1309, %v1323
        %v1326 = vmul.f32 %v1310, %v1324
        %v1328 = vlaneseq
        %v1329 = vshrl.u32 %v1328, 7
        %v1330 = vsub.s32 0, %v1329
        %v1331 = vrot.slane %v1299, %v1330
        %v1333 = vmul.f32 %v1325, %v1331
        %v1334 = vmul.f32 %v1326, %v1331
        %v1336 = vlaneseq
        %v1337 = vshrl.u32 %v1336, 7
        %v1338 = vsub.s32 0, %v1337
        %v1339 = vrot.slane %v1300, %v1338
        %v1341 = vadd.f32 %v1333, %v1339
        %v1342 = vadd.f32 %v1334, %v1339
        %v1343 = vpack.c.bf16 %v1342, %v1341
        %v1344 = vld [vmem:[%s10] sm:$0xf]
        %v1345 = vld [vmem:[%s10 + $0x4] sm:$0xf]
        %v1346 = vld [vmem:[%s10 + $0x8] sm:$0xf]
        %v1347 = vld [vmem:[%s10 + $0xc] sm:$0xf]
        %v1348 = vld [vmem:[%s11] sm:$0x1]
        %v1350 = vlaneseq
        %v1351 = vshrl.u32 %v1350, 7
        %v1352 = vsub.s32 0, %v1351
        %v1353 = vrot.slane %v1348, %v1352
        %v1359 = vunpack.c.l.b16 %v1344
        %v1360 = vunpack.c.l.b16 %v1345
        %v1361 = vunpack.c.l.b16 %v1346
        %v1362 = vunpack.c.l.b16 %v1347
        %v1363 = vpack.c.b16 %v1360, %v1359
        %v1364 = vpack.c.b16 %v1362, %v1361
        %v1368 = vsel %vm578, %v1343, 0
        %1370 = vmatprep.subr.bf16.mxu0 0
        %1371 = vmatpush1.bf16.msra.mxu0 %v1363
        %1372 = vmatprep.subr.bf16.mxu0 0
        %1373 = vmatpush1.bf16.msra.mxu0 %v1364
        %1374 = vmatprep.subr.bf16.mxu0 0
        %1375 = vmatpush1.bf16.msra.mxu0 0
        %1376 = vmatprep.subr.bf16.mxu0 0
        %1377 = vmatpush1.bf16.msra.mxu0 0
        %1378 = vmatprep.subr.bf16.mxu0 0
        %1379 = vmatpush1.bf16.msra.mxu0 0
        %1380 = vmatprep.subr.bf16.mxu0 0
        %1381 = vmatpush1.bf16.msra.mxu0 0
        %1382 = vmatprep.subr.bf16.mxu0 0
        %1383 = vmatpush1.bf16.msra.mxu0 0
        %1384 = vmatprep.subr.bf16.mxu0 0
        %1385 = vmatpush1.bf16.msra.mxu0 0
        %1386 = vmatprep.subr.bf16.mxu0 0
        %1387 = vmatpush1.bf16.msra.mxu0 0
        %1388 = vmatprep.subr.bf16.mxu0 0
        %1389 = vmatpush1.bf16.msra.mxu0 0
        %1390 = vmatprep.subr.bf16.mxu0 0
        %1391 = vmatpush1.bf16.msra.mxu0 0
        %1392 = vmatprep.subr.bf16.mxu0 0
        %1393 = vmatpush1.bf16.msra.mxu0 0
        %1394 = vmatprep.subr.bf16.mxu0 0
        %1395 = vmatpush1.bf16.msra.mxu0 0
        %1396 = vmatprep.subr.bf16.mxu0 0
        %1397 = vmatpush1.bf16.msra.mxu0 0
        %1398 = vmatprep.subr.bf16.mxu0 0
        %1399 = vmatpush1.bf16.msra.mxu0 0
        %1400 = vmatprep.subr.bf16.mxu0 0
        %1401 = vmatpush1.bf16.msra.mxu0 0
        %1402 = vmatprep.mubr.bf16.mxu0 0
        %1403 = vmatmul.mubr.bf16.gmra.mrb[0].mxu0 %v1368
        %v1404 = vpop.f32.mrb[0].mxu0
        %v1405 = vadd.f32 %v1353, %v1404
        %v1406 = vpop.f32.mrb[0].mxu0
        %v1407 = vpop.f32.mrb[0].mxu0
        %v1408 = vadd.f32 %v1353, %v1407
        %v1409 = vpop.f32.mrb[0].mxu0
        %1410 = vdwg.mxu0
        %v1411 = vmul.f32 %v1405, 0.5
        %v1412 = vmul.f32 %v1408, 0.5
        %v1413 = vmul.f32 %v1405, 0.70710677
        %v1414 = vmul.f32 %v1408, 0.70710677
        %v1415 = verf.f32.pop %v1413
        %v1416 = verf.f32.pop %v1414
        %v1417 = vadd.f32 %v1415, 1.0
        %v1418 = vadd.f32 %v1416, 1.0
        %v1419 = vmul.f32 %v1411, %v1417
        %v1420 = vmul.f32 %v1412, %v1418
        %v1421 = vpack.c.bf16 %v1420, %v1419
        %v1422 = vld [vmem:[%s12] sm:$0xf]
        %v1423 = vld [vmem:[%s12 + $0x4] sm:$0xf]
        %v1424 = vld [vmem:[%s12 + $0x8] sm:$0xf]
        %v1425 = vld [vmem:[%s12 + $0xc] sm:$0xf]
        %v1426 = vld [vmem:[%s12 + $0x10] sm:$0xf]
        %v1427 = vld [vmem:[%s12 + $0x14] sm:$0xf]
        %v1428 = vld [vmem:[%s12 + $0x18] sm:$0xf]
        %v1429 = vld [vmem:[%s12 + $0x1c] sm:$0xf]
        %v1430 = vld [vmem:[%s13] sm:$0x1]
        %v1432 = vlaneseq
        %v1433 = vshrl.u32 %v1432, 7
        %v1434 = vsub.s32 0, %v1433
        %v1435 = vrot.slane %v1430, %v1434
        %v1445 = vunpack.c.l.b16 %v1422
        %v1446 = vunpack.c.l.b16 %v1423
        %v1447 = vunpack.c.l.b16 %v1424
        %v1448 = vunpack.c.l.b16 %v1425
        %v1449 = vunpack.c.l.b16 %v1426
        %v1450 = vunpack.c.l.b16 %v1427
        %v1451 = vunpack.c.l.b16 %v1428
        %v1452 = vunpack.c.l.b16 %v1429
        %v1453 = vpack.c.b16 %v1446, %v1445
        %v1454 = vpack.c.b16 %v1448, %v1447
        %v1455 = vpack.c.b16 %v1450, %v1449
        %v1456 = vpack.c.b16 %v1452, %v1451
        %vm1461 = vcmask 523264
        %v1463 = vsel %vm1461, %v1421, 0
        %1465 = vmatprep.subr.bf16.mxu0 0
        %1466 = vmatpush1.bf16.msra.mxu0 %v1453
        %1467 = vmatprep.subr.bf16.mxu0 0
        %1468 = vmatpush1.bf16.msra.mxu0 %v1454
        %1469 = vmatprep.subr.bf16.mxu0 0
        %1470 = vmatpush1.bf16.msra.mxu0 %v1455
        %1471 = vmatprep.subr.bf16.mxu0 0
        %1472 = vmatpush1.bf16.msra.mxu0 %v1456
        %1473 = vmatprep.subr.bf16.mxu0 0
        %1474 = vmatpush1.bf16.msra.mxu0 0
        %1475 = vmatprep.subr.bf16.mxu0 0
        %1476 = vmatpush1.bf16.msra.mxu0 0
        %1477 = vmatprep.subr.bf16.mxu0 0
        %1478 = vmatpush1.bf16.msra.mxu0 0
        %1479 = vmatprep.subr.bf16.mxu0 0
        %1480 = vmatpush1.bf16.msra.mxu0 0
        %1481 = vmatprep.subr.bf16.mxu0 0
        %1482 = vmatpush1.bf16.msra.mxu0 0
        %1483 = vmatprep.subr.bf16.mxu0 0
        %1484 = vmatpush1.bf16.msra.mxu0 0
        %1485 = vmatprep.subr.bf16.mxu0 0
        %1486 = vmatpush1.bf16.msra.mxu0 0
        %1487 = vmatprep.subr.bf16.mxu0 0
        %1488 = vmatpush1.bf16.msra.mxu0 0
        %1489 = vmatprep.subr.bf16.mxu0 0
        %1490 = vmatpush1.bf16.msra.mxu0 0
        %1491 = vmatprep.subr.bf16.mxu0 0
        %1492 = vmatpush1.bf16.msra.mxu0 0
        %1493 = vmatprep.subr.bf16.mxu0 0
        %1494 = vmatpush1.bf16.msra.mxu0 0
        %1495 = vmatprep.subr.bf16.mxu0 0
        %1496 = vmatpush1.bf16.msra.mxu0 0
        %1497 = vmatprep.mubr.bf16.mxu0 0
        %1498 = vmatmul.mubr.bf16.gmra.mrb[0].mxu0 %v1463
        %v1499 = vpop.f32.mrb[0].mxu0
        %v1500 = vadd.f32 %v1435, %v1499
        %v1501 = vpop.f32.mrb[0].mxu0
        %v1502 = vpop.f32.mrb[0].mxu0
        %v1503 = vadd.f32 %v1435, %v1502
        %v1504 = vpop.f32.mrb[0].mxu0
        %1505 = vdwg.mxu0
        %v1506 = vadd.f32 %v1500, %v1297
        %v1507 = vadd.f32 %v1503, %v1298
        %1508 = vst.msk [vmem:[%s565] sm:$0xff] %vm578, %v1506
        %1509 = vst.msk [vmem:[%s565 + $0x8] sm:$0xff] %vm578, %v1507
        %s1510 = sand.u32 %s346, 1
        %s1511 = scalar_lea.sflag [#allocation5], %s1510
        %s1512 = sand.u32 %s346, 1
        %s1513 = smul.addr %s1512, 16
        %s1514 = scalar_lea.vmem [#allocation14], %s1513
        // Predicated region
        $region101: #{tpu_custom_call.1} parent=75 // pred_check
          %p1515 = pneg %p356
        $region102: #{tpu_custom_call.1} parent=75 // pred_check_branch
          %1517 = sbr.rel (%p1515) target = $region104
        $region103: #{tpu_custom_call.1} parent=75 // pred_region
          %s1519 = ssub.s32 256, 256
          %1520 = vsyncadd %s1511, %s1519
          %s1521 = smul.addr %s34, 2
          %s1522 = smul.addr %s1521, 128
          %s1523 = scalar_lea.hbm %s14, %s1522
          %s1524 = sshll.u32 %s1514, 4
          %s1525 = int_to_ptr.vmem [resolvable:$true] %s1524
          %1530 = dma.vmem_to_hbm [thread:$0]  %s1525, 256, %s1523, %s1511, 128, 128, 8
        $region104: #{tpu_custom_call.1} parent=75 // pred_fallthru
          _
      $region76: #{tpu_custom_call.1} parent=5 // pred_fallthru
        _
      %p1531 = scmp.le.s32.totalorder 2, %s29
      // Predicated region
      $region105: #{tpu_custom_call.1} parent=5 // pred_check
        %p1532 = pneg %p1531
      $region106: #{tpu_custom_call.1} parent=5 // pred_check_branch
        %1534 = sbr.rel (%p1532) target = $region108
      $region107: #{tpu_custom_call.1} parent=5 // pred_region
        %s1535 = ssub.s32 %s29, 2
        // Predicated region
        $region109: #{tpu_custom_call.1} parent=107 // pred_check
          %p1536 = pneg %p362
        $region110: #{tpu_custom_call.1} parent=107 // pred_check_branch
          %1538 = sbr.rel (%p1536) target = $region112
        $region111: #{tpu_custom_call.1} parent=107 // pred_region
          %s1539 = sand.u32 %s347, 1
          %s1540 = scalar_lea.sflag [#allocation5], %s1539
          %s1541 = sand.u32 %s347, 1
          %s1542 = smul.addr %s1541, 16
          %s1543 = scalar_lea.vmem [#allocation14], %s1542
          %1544 = dma.done %s1540, 256
        $region112: #{tpu_custom_call.1} parent=107 // pred_fallthru
          _
      $region108: #{tpu_custom_call.1} parent=5 // pred_fallthru
        _
    $region6: #{tpu_custom_call.1} parent=1 // loop_footer
      %s33 = sadd.s32 1, %s29
    $region7: #{tpu_custom_call.1} parent=1 // loop_footer_branch
      %28 = sbr.rel target = $region3
    $region8: #{tpu_custom_call.1} parent=1 // loop_exit
      _
    %1545 = vsyncpa [#allocation4], 1
    %s1546 = scalar_lea.sflag [#allocation4], 1
    %1547 = vsyncpa %s1546, 1
    %1548 = vsyncpa [#allocation7], 1
    %1549 = vsyncpa [#allocation10], 1
    %1550 = vsyncpa [#allocation13], 1
    %1551 = vsyncpa [#allocation5], 1
    %s1552 = scalar_lea.sflag [#allocation5], 1
    %1553 = vsyncpa %s1552, 1

</llo_original>
